<compile_context>
chip_gen: v7x
topology: tpu7x:2x2x1
jax: 0.10.0
libtpu: 0.0.40
codegen_flags: <defaults>
</compile_context>

<pallas_src>
import functools

import jax
import jax.numpy as jnp
from jax.experimental import pallas as pl
from jax.experimental.pallas import tpu as pltpu


def _round_up(x, m):
    return ((x + m - 1) // m) * m


def rnn_kernel(x_ref, u_ref, w_ref, v_ref, b_ref, h0_ref, out_ref, xu_ref,
               *, n_classes):
    """One block of `bt` sentences.

    x_ref:   (bt, seq, in)      f32 input block (natural layout, no host transpose)
    u_ref:   (in, hidden)       bf16
    w_ref:   (hidden, hidden)   bf16
    v_ref:   (hidden, out_pad)  f32, zero-padded columns (lane-dense)
    b_ref:   (1, hidden)        f32
    h0_ref:  (1, hidden)        f32
    out_ref: (bt, out_pad)      f32 softmax probs (padded lanes written as 0)
    xu_ref:  (seq, bt, hidden)  f32 VMEM scratch for the hoisted projection
    """
    bt = out_ref.shape[0]
    seq = x_ref.shape[1]
    hidden = w_ref.shape[1]

    U = u_ref[...]
    W = w_ref[...]
    b = b_ref[...]

    # Hoisted input projection (+ bias): seq independent MXU matmuls, staged in
    # VMEM scratch so the unrolled recurrence never spills vregs at large bt.
    # These never sit on the serial h-chain.
    for t in range(seq):
        xt = x_ref[:, t, :].astype(jnp.bfloat16)
        xu_ref[t] = jnp.dot(xt, U, preferred_element_type=jnp.float32) + b

    # Recurrence, fully unrolled (seq is static & small); per-step critical
    # path is just bf16 h@W -> add -> tanh (EUP).
    # TODO(synk): switch to lax.fori_loop(..., unroll=True) if seq grows large.
    h = jnp.broadcast_to(h0_ref[...], (bt, hidden))
    for t in range(seq):
        pre = jnp.dot(h.astype(jnp.bfloat16), W,
                      preferred_element_type=jnp.float32)
        h = jnp.tanh(pre + xu_ref[t])

    # Only the final step's o is used (matches the PyTorch loop).  Kept in f32
    # (single tiny matmul, off the serial chain) so the softmax stays exact.
    o = jnp.dot(h, v_ref[...], preferred_element_type=jnp.float32)  # (bt, out_pad)

    # Masked softmax over the real classes; padded lanes are written as 0 so
    # the (bt, out_pad) store is a full-width, unmasked, lane-dense store.
    col = jax.lax.broadcasted_iota(jnp.int32, o.shape, 1)
    valid = col < n_classes
    om = jnp.where(valid, o, jnp.float32(-1e30))
    m = jnp.max(om, axis=-1, keepdims=True)
    e = jnp.where(valid, jnp.exp(om - m), jnp.float32(0.0))
    denom = jnp.sum(e, axis=-1, keepdims=True)
    out_ref[...] = e / denom          # exact normalization: rows sum to 1


def _choose_batch_tile(B, seq, in_size, target_block_bytes=2 << 20):
    """Pick a batch tile: large enough to amortize the ~0.35us/step grid
    overhead and fill the MXU M dimension (~2 MiB input blocks), small enough
    to keep >=2 tiles when the batch allows (feeds both v7x TensorCores).
    Rows are kept a multiple of 8 (sublane)."""
    row_bytes = seq * in_size * 4
    bt = max(8, (target_block_bytes // row_bytes) // 8 * 8)
    b8 = _round_up(B, 8)
    if b8 >= 16:
        bt = min(bt, _round_up((b8 + 1) // 2, 8))  # >=2 tiles (v7x megacore)
    return int(min(bt, b8))


def lang_class_rnn_forward_batched(sentences, U, W, V, b, h0, *, batch_tile=None):
    """sentences: (B, seq, input_size). Returns (B, out_dims) softmax probs."""
    B, seq, in_size = sentences.shape
    hidden = U.shape[1]
    out_dims = V.shape[1]
    out_pad = _round_up(out_dims, 128)

    bt = batch_tile if batch_tile is not None else _choose_batch_tile(B, seq, in_size)
    assert bt % 8 == 0, "batch tile must be a sublane multiple"
    Bp = _round_up(B, bt)
    num_tiles = Bp // bt

    x = sentences.astype(jnp.float32)
    if Bp != B:
        # Only the batch axis is padded; padded rows produce finite garbage
        # that is sliced off below.  No time-major transpose / reshape: the
        # kernel slices per-timestep rows straight out of the natural layout.
        x = jnp.pad(x, ((0, Bp - B), (0, 0), (0, 0)))

    u_bf = U.astype(jnp.bfloat16)
    w_bf = W.astype(jnp.bfloat16)
    v_pad = jnp.pad(V.astype(jnp.float32), ((0, 0), (0, out_pad - out_dims)))
    b2 = b.reshape(1, hidden).astype(jnp.float32)
    h02 = h0.reshape(1, hidden).astype(jnp.float32)

    # VMEM guardrail (matters most on v7x: 64 MiB physical / 32 MiB scoped).
    hidden_lanes = _round_up(hidden, 128)
    vmem_est = (2 * bt * seq * in_size * 4           # double-buffered input block
                + seq * bt * hidden_lanes * 4        # xu scratch (lane-padded)
                + 2 * bt * out_pad * 4               # double-buffered output block
                + (in_size + 2 * hidden) * hidden_lanes * 4)  # weights (approx)
    assert vmem_est < (24 << 20), (
        f"estimated VMEM {vmem_est / 2**20:.1f} MiB too large; "
        f"reduce batch_tile ({bt})")

    cost = pl.CostEstimate(
        flops=2 * Bp * seq * (in_size * hidden + hidden * hidden)
        + 2 * Bp * hidden * out_pad,
        transcendentals=Bp * seq * hidden + Bp * out_dims,
        bytes_accessed=4 * (Bp * seq * in_size + Bp * out_pad)
        + 2 * (in_size * hidden + hidden * hidden)
        + 4 * (hidden * out_pad + 2 * hidden),
    )

    kernel = functools.partial(rnn_kernel, n_classes=out_dims)

    out = pl.pallas_call(
        kernel,
        out_shape=jax.ShapeDtypeStruct((Bp, out_pad), jnp.float32),
        grid=(num_tiles,),
        in_specs=[
            pl.BlockSpec((bt, seq, in_size), lambda i: (i, 0, 0)),
            pl.BlockSpec((in_size, hidden), lambda i: (0, 0)),
            pl.BlockSpec((hidden, hidden), lambda i: (0, 0)),
            pl.BlockSpec((hidden, out_pad), lambda i: (0, 0)),
            pl.BlockSpec((1, hidden), lambda i: (0, 0)),
            pl.BlockSpec((1, hidden), lambda i: (0, 0)),
        ],
        out_specs=pl.BlockSpec((bt, out_pad), lambda i: (i, 0)),
        scratch_shapes=[pltpu.VMEM((seq, bt, hidden), jnp.float32)],
        compiler_params=pltpu.CompilerParams(
            dimension_semantics=("parallel",)),
        cost_estimate=cost,
    )(x, u_bf, w_bf, v_pad, b2, h02)
    return out[:B, :out_dims]


def lang_class_rnn_forward(sentence, U, W, V, b, h0):
    """Single-sentence forward matching LangClassRNN.forward semantics."""
    out = lang_class_rnn_forward_batched(sentence[None], U, W, V, b, h0)
    return out[0]


def reference_forward(sentence, U, W, V, b, h0):
    h = h0
    o = None
    for t in range(sentence.shape[0]):
        a = sentence[t] @ U + h @ W + b
        h = jnp.tanh(a)
        o = h @ V
    return jax.nn.softmax(o, axis=0)


if __name__ == "__main__":
    # Small synthetic shapes consistent with the module:
    #   input_size = bigram count, hidden_size, out_dims = #languages.
    B = 16
    seq = 8
    input_size = 64
    hidden_size = 32
    out_dims = 8

    key = jax.random.PRNGKey(0)
    k_sent, k_u, k_v, k_b = jax.random.split(key, 4)

    # Parameter init mirroring __init__:
    #   U = rand(in, hidden), W = ones(hidden, hidden), V = rand(hidden, out),
    #   b = rand(hidden), h = ones(hidden)
    sentences = jax.random.uniform(k_sent, (B, seq, input_size), dtype=jnp.float32)
    U = jax.random.uniform(k_u, (input_size, hidden_size), dtype=jnp.float32)
    W = jnp.ones((hidden_size, hidden_size), dtype=jnp.float32)
    V = jax.random.uniform(k_v, (hidden_size, out_dims), dtype=jnp.float32)
    b = jax.random.uniform(k_b, (hidden_size,), dtype=jnp.float32)
    h0 = jnp.ones((hidden_size,), dtype=jnp.float32)

    # Batched path (the throughput path): B=16 -> 2 tiles of 8 -> parallel grid.
    yhat_b = jax.block_until_ready(
        lang_class_rnn_forward_batched(sentences, U, W, V, b, h0))
    ref_b = jnp.stack(
        [reference_forward(sentences[i], U, W, V, b, h0) for i in range(B)])
    assert yhat_b.shape == (B, out_dims)
    assert jnp.allclose(yhat_b, ref_b, atol=2e-3, rtol=0.0), \
        float(jnp.max(jnp.abs(yhat_b - ref_b)))
    assert jnp.allclose(jnp.sum(yhat_b, axis=-1), 1.0, atol=1e-3)

    # Single-sentence path (the exact LangClassRNN.forward contract).
    yhat_1 = jax.block_until_ready(
        lang_class_rnn_forward(sentences[0], U, W, V, b, h0))
    assert yhat_1.shape == (out_dims,)
    assert jnp.allclose(yhat_1, ref_b[0], atol=2e-3, rtol=0.0)

    print("KERNEL_OK")
</pallas_src>

<mosaic_0001>
module attributes {stable_mosaic.version = 11 : i64} {
  func.func @rnn_kernel(%arg0: i32, %arg1: memref<8x8x64xf32, #tpu.memory_space<vmem>>, %arg2: memref<64x32xbf16, #tpu.memory_space<vmem>>, %arg3: memref<32x32xbf16, #tpu.memory_space<vmem>>, %arg4: memref<32x128xf32, #tpu.memory_space<vmem>>, %arg5: memref<1x32xf32, #tpu.memory_space<vmem>>, %arg6: memref<1x32xf32, #tpu.memory_space<vmem>>, %arg7: memref<8x128xf32, #tpu.memory_space<vmem>>, %arg8: memref<8x8x32xf32, #tpu.memory_space<vmem>>) attributes {dimension_semantics = [#tpu.dimension_semantics<parallel>], iteration_bounds = array<i64: 2>, scalar_prefetch = 0 : i64, scratch_operands = 1 : i64, tpu.core_type = #tpu.core_type<tc>, window_params = [{transform_indices = @transform_0, window_bounds = array<i64: 8, 8, 64>}, {pipeline_mode = #tpu.pipeline_mode<synchronous>, transform_indices = @transform_1, window_bounds = array<i64: 64, 32>}, {pipeline_mode = #tpu.pipeline_mode<synchronous>, transform_indices = @transform_2, window_bounds = array<i64: 32, 32>}, {pipeline_mode = #tpu.pipeline_mode<synchronous>, transform_indices = @transform_3, window_bounds = array<i64: 32, 128>}, {pipeline_mode = #tpu.pipeline_mode<synchronous>, transform_indices = @transform_4, window_bounds = array<i64: 1, 32>}, {pipeline_mode = #tpu.pipeline_mode<synchronous>, transform_indices = @transform_5, window_bounds = array<i64: 1, 32>}, {transform_indices = @transform_6, window_bounds = array<i64: 8, 128>}]} {
    %c0 = arith.constant 0 : index
    %c0_0 = arith.constant 0 : index
    %0 = vector.load %arg2[%c0, %c0_0] : memref<64x32xbf16, #tpu.memory_space<vmem>>, vector<64x32xbf16>
    %c0_1 = arith.constant 0 : index
    %c0_2 = arith.constant 0 : index
    %1 = vector.load %arg3[%c0_1, %c0_2] : memref<32x32xbf16, #tpu.memory_space<vmem>>, vector<32x32xbf16>
    %c0_3 = arith.constant 0 : index
    %c0_4 = arith.constant 0 : index
    %2 = vector.load %arg5[%c0_3, %c0_4] : memref<1x32xf32, #tpu.memory_space<vmem>>, vector<1x32xf32>
    %c0_5 = arith.constant 0 : index
    %c0_6 = arith.constant 0 : index
    %c0_7 = arith.constant 0 : index
    %3 = vector.load %arg1[%c0_5, %c0_6, %c0_7] : memref<8x8x64xf32, #tpu.memory_space<vmem>>, vector<8x1x64xf32>
    %4 = vector.shape_cast %3 : vector<8x1x64xf32> to vector<8x64xf32>
    %5 = arith.truncf %4 : vector<8x64xf32> to vector<8x64xbf16>
    %cst = arith.constant dense<0.000000e+00> : vector<8x32xf32>
    %6 = tpu.matmul %5, %0, %cst {dimension_numbers = #tpu.dot_dimension_numbers<[1], [0], [0], [1], [0, 0, 1, 1], [], []>} : vector<8x64xbf16>, vector<64x32xbf16>, vector<8x32xf32> -> vector<8x32xf32>
    %7 = vector.broadcast %2 : vector<1x32xf32> to vector<8x32xf32>
    %8 = arith.addf %6, %7 : vector<8x32xf32>
    %c0_8 = arith.constant 0 : index
    %c0_9 = arith.constant 0 : index
    %c0_10 = arith.constant 0 : index
    %9 = vector.load %arg8[%c0_8, %c0_9, %c0_10] : memref<8x8x32xf32, #tpu.memory_space<vmem>>, vector<1x8x32xf32>
    %10 = vector.shape_cast %9 : vector<1x8x32xf32> to vector<8x32xf32>
    %11 = vector.shape_cast %8 : vector<8x32xf32> to vector<1x8x32xf32>
    tpu.vector_store %arg8[%c0_8, %c0_9, %c0_10], %11 {strides = array<i32>} : memref<8x8x32xf32, #tpu.memory_space<vmem>>, vector<1x8x32xf32>,
    %c0_11 = arith.constant 0 : index
    %c1 = arith.constant 1 : index
    %c0_12 = arith.constant 0 : index
    %12 = vector.load %arg1[%c0_11, %c1, %c0_12] : memref<8x8x64xf32, #tpu.memory_space<vmem>>, vector<8x1x64xf32>
    %13 = vector.shape_cast %12 : vector<8x1x64xf32> to vector<8x64xf32>
    %14 = arith.truncf %13 : vector<8x64xf32> to vector<8x64xbf16>
    %cst_13 = arith.constant dense<0.000000e+00> : vector<8x32xf32>
    %15 = tpu.matmul %14, %0, %cst_13 {dimension_numbers = #tpu.dot_dimension_numbers<[1], [0], [0], [1], [0, 0, 1, 1], [], []>} : vector<8x64xbf16>, vector<64x32xbf16>, vector<8x32xf32> -> vector<8x32xf32>
    %16 = vector.broadcast %2 : vector<1x32xf32> to vector<8x32xf32>
    %17 = arith.addf %15, %16 : vector<8x32xf32>
    %c1_14 = arith.constant 1 : index
    %c0_15 = arith.constant 0 : index
    %c0_16 = arith.constant 0 : index
    %18 = vector.load %arg8[%c1_14, %c0_15, %c0_16] : memref<8x8x32xf32, #tpu.memory_space<vmem>>, vector<1x8x32xf32>
    %19 = vector.shape_cast %18 : vector<1x8x32xf32> to vector<8x32xf32>
    %20 = vector.shape_cast %17 : vector<8x32xf32> to vector<1x8x32xf32>
    tpu.vector_store %arg8[%c1_14, %c0_15, %c0_16], %20 {strides = array<i32>} : memref<8x8x32xf32, #tpu.memory_space<vmem>>, vector<1x8x32xf32>,
    %c0_17 = arith.constant 0 : index
    %c2 = arith.constant 2 : index
    %c0_18 = arith.constant 0 : index
    %21 = vector.load %arg1[%c0_17, %c2, %c0_18] : memref<8x8x64xf32, #tpu.memory_space<vmem>>, vector<8x1x64xf32>
    %22 = vector.shape_cast %21 : vector<8x1x64xf32> to vector<8x64xf32>
    %23 = arith.truncf %22 : vector<8x64xf32> to vector<8x64xbf16>
    %cst_19 = arith.constant dense<0.000000e+00> : vector<8x32xf32>
    %24 = tpu.matmul %23, %0, %cst_19 {dimension_numbers = #tpu.dot_dimension_numbers<[1], [0], [0], [1], [0, 0, 1, 1], [], []>} : vector<8x64xbf16>, vector<64x32xbf16>, vector<8x32xf32> -> vector<8x32xf32>
    %25 = vector.broadcast %2 : vector<1x32xf32> to vector<8x32xf32>
    %26 = arith.addf %24, %25 : vector<8x32xf32>
    %c2_20 = arith.constant 2 : index
    %c0_21 = arith.constant 0 : index
    %c0_22 = arith.constant 0 : index
    %27 = vector.load %arg8[%c2_20, %c0_21, %c0_22] : memref<8x8x32xf32, #tpu.memory_space<vmem>>, vector<1x8x32xf32>
    %28 = vector.shape_cast %27 : vector<1x8x32xf32> to vector<8x32xf32>
    %29 = vector.shape_cast %26 : vector<8x32xf32> to vector<1x8x32xf32>
    tpu.vector_store %arg8[%c2_20, %c0_21, %c0_22], %29 {strides = array<i32>} : memref<8x8x32xf32, #tpu.memory_space<vmem>>, vector<1x8x32xf32>,
    %c0_23 = arith.constant 0 : index
    %c3 = arith.constant 3 : index
    %c0_24 = arith.constant 0 : index
    %30 = vector.load %arg1[%c0_23, %c3, %c0_24] : memref<8x8x64xf32, #tpu.memory_space<vmem>>, vector<8x1x64xf32>
    %31 = vector.shape_cast %30 : vector<8x1x64xf32> to vector<8x64xf32>
    %32 = arith.truncf %31 : vector<8x64xf32> to vector<8x64xbf16>
    %cst_25 = arith.constant dense<0.000000e+00> : vector<8x32xf32>
    %33 = tpu.matmul %32, %0, %cst_25 {dimension_numbers = #tpu.dot_dimension_numbers<[1], [0], [0], [1], [0, 0, 1, 1], [], []>} : vector<8x64xbf16>, vector<64x32xbf16>, vector<8x32xf32> -> vector<8x32xf32>
    %34 = vector.broadcast %2 : vector<1x32xf32> to vector<8x32xf32>
    %35 = arith.addf %33, %34 : vector<8x32xf32>
    %c3_26 = arith.constant 3 : index
    %c0_27 = arith.constant 0 : index
    %c0_28 = arith.constant 0 : index
    %36 = vector.load %arg8[%c3_26, %c0_27, %c0_28] : memref<8x8x32xf32, #tpu.memory_space<vmem>>, vector<1x8x32xf32>
    %37 = vector.shape_cast %36 : vector<1x8x32xf32> to vector<8x32xf32>
    %38 = vector.shape_cast %35 : vector<8x32xf32> to vector<1x8x32xf32>
    tpu.vector_store %arg8[%c3_26, %c0_27, %c0_28], %38 {strides = array<i32>} : memref<8x8x32xf32, #tpu.memory_space<vmem>>, vector<1x8x32xf32>,
    %c0_29 = arith.constant 0 : index
    %c4 = arith.constant 4 : index
    %c0_30 = arith.constant 0 : index
    %39 = vector.load %arg1[%c0_29, %c4, %c0_30] : memref<8x8x64xf32, #tpu.memory_space<vmem>>, vector<8x1x64xf32>
    %40 = vector.shape_cast %39 : vector<8x1x64xf32> to vector<8x64xf32>
    %41 = arith.truncf %40 : vector<8x64xf32> to vector<8x64xbf16>
    %cst_31 = arith.constant dense<0.000000e+00> : vector<8x32xf32>
    %42 = tpu.matmul %41, %0, %cst_31 {dimension_numbers = #tpu.dot_dimension_numbers<[1], [0], [0], [1], [0, 0, 1, 1], [], []>} : vector<8x64xbf16>, vector<64x32xbf16>, vector<8x32xf32> -> vector<8x32xf32>
    %43 = vector.broadcast %2 : vector<1x32xf32> to vector<8x32xf32>
    %44 = arith.addf %42, %43 : vector<8x32xf32>
    %c4_32 = arith.constant 4 : index
    %c0_33 = arith.constant 0 : index
    %c0_34 = arith.constant 0 : index
    %45 = vector.load %arg8[%c4_32, %c0_33, %c0_34] : memref<8x8x32xf32, #tpu.memory_space<vmem>>, vector<1x8x32xf32>
    %46 = vector.shape_cast %45 : vector<1x8x32xf32> to vector<8x32xf32>
    %47 = vector.shape_cast %44 : vector<8x32xf32> to vector<1x8x32xf32>
    tpu.vector_store %arg8[%c4_32, %c0_33, %c0_34], %47 {strides = array<i32>} : memref<8x8x32xf32, #tpu.memory_space<vmem>>, vector<1x8x32xf32>,
    %c0_35 = arith.constant 0 : index
    %c5 = arith.constant 5 : index
    %c0_36 = arith.constant 0 : index
    %48 = vector.load %arg1[%c0_35, %c5, %c0_36] : memref<8x8x64xf32, #tpu.memory_space<vmem>>, vector<8x1x64xf32>
    %49 = vector.shape_cast %48 : vector<8x1x64xf32> to vector<8x64xf32>
    %50 = arith.truncf %49 : vector<8x64xf32> to vector<8x64xbf16>
    %cst_37 = arith.constant dense<0.000000e+00> : vector<8x32xf32>
    %51 = tpu.matmul %50, %0, %cst_37 {dimension_numbers = #tpu.dot_dimension_numbers<[1], [0], [0], [1], [0, 0, 1, 1], [], []>} : vector<8x64xbf16>, vector<64x32xbf16>, vector<8x32xf32> -> vector<8x32xf32>
    %52 = vector.broadcast %2 : vector<1x32xf32> to vector<8x32xf32>
    %53 = arith.addf %51, %52 : vector<8x32xf32>
    %c5_38 = arith.constant 5 : index
    %c0_39 = arith.constant 0 : index
    %c0_40 = arith.constant 0 : index
    %54 = vector.load %arg8[%c5_38, %c0_39, %c0_40] : memref<8x8x32xf32, #tpu.memory_space<vmem>>, vector<1x8x32xf32>
    %55 = vector.shape_cast %54 : vector<1x8x32xf32> to vector<8x32xf32>
    %56 = vector.shape_cast %53 : vector<8x32xf32> to vector<1x8x32xf32>
    tpu.vector_store %arg8[%c5_38, %c0_39, %c0_40], %56 {strides = array<i32>} : memref<8x8x32xf32, #tpu.memory_space<vmem>>, vector<1x8x32xf32>,
    %c0_41 = arith.constant 0 : index
    %c6 = arith.constant 6 : index
    %c0_42 = arith.constant 0 : index
    %57 = vector.load %arg1[%c0_41, %c6, %c0_42] : memref<8x8x64xf32, #tpu.memory_space<vmem>>, vector<8x1x64xf32>
    %58 = vector.shape_cast %57 : vector<8x1x64xf32> to vector<8x64xf32>
    %59 = arith.truncf %58 : vector<8x64xf32> to vector<8x64xbf16>
    %cst_43 = arith.constant dense<0.000000e+00> : vector<8x32xf32>
    %60 = tpu.matmul %59, %0, %cst_43 {dimension_numbers = #tpu.dot_dimension_numbers<[1], [0], [0], [1], [0, 0, 1, 1], [], []>} : vector<8x64xbf16>, vector<64x32xbf16>, vector<8x32xf32> -> vector<8x32xf32>
    %61 = vector.broadcast %2 : vector<1x32xf32> to vector<8x32xf32>
    %62 = arith.addf %60, %61 : vector<8x32xf32>
    %c6_44 = arith.constant 6 : index
    %c0_45 = arith.constant 0 : index
    %c0_46 = arith.constant 0 : index
    %63 = vector.load %arg8[%c6_44, %c0_45, %c0_46] : memref<8x8x32xf32, #tpu.memory_space<vmem>>, vector<1x8x32xf32>
    %64 = vector.shape_cast %63 : vector<1x8x32xf32> to vector<8x32xf32>
    %65 = vector.shape_cast %62 : vector<8x32xf32> to vector<1x8x32xf32>
    tpu.vector_store %arg8[%c6_44, %c0_45, %c0_46], %65 {strides = array<i32>} : memref<8x8x32xf32, #tpu.memory_space<vmem>>, vector<1x8x32xf32>,
    %c0_47 = arith.constant 0 : index
    %c7 = arith.constant 7 : index
    %c0_48 = arith.constant 0 : index
    %66 = vector.load %arg1[%c0_47, %c7, %c0_48] : memref<8x8x64xf32, #tpu.memory_space<vmem>>, vector<8x1x64xf32>
    %67 = vector.shape_cast %66 : vector<8x1x64xf32> to vector<8x64xf32>
    %68 = arith.truncf %67 : vector<8x64xf32> to vector<8x64xbf16>
    %cst_49 = arith.constant dense<0.000000e+00> : vector<8x32xf32>
    %69 = tpu.matmul %68, %0, %cst_49 {dimension_numbers = #tpu.dot_dimension_numbers<[1], [0], [0], [1], [0, 0, 1, 1], [], []>} : vector<8x64xbf16>, vector<64x32xbf16>, vector<8x32xf32> -> vector<8x32xf32>
    %70 = vector.broadcast %2 : vector<1x32xf32> to vector<8x32xf32>
    %71 = arith.addf %69, %70 : vector<8x32xf32>
    %c7_50 = arith.constant 7 : index
    %c0_51 = arith.constant 0 : index
    %c0_52 = arith.constant 0 : index
    %72 = vector.load %arg8[%c7_50, %c0_51, %c0_52] : memref<8x8x32xf32, #tpu.memory_space<vmem>>, vector<1x8x32xf32>
    %73 = vector.shape_cast %72 : vector<1x8x32xf32> to vector<8x32xf32>
    %74 = vector.shape_cast %71 : vector<8x32xf32> to vector<1x8x32xf32>
    tpu.vector_store %arg8[%c7_50, %c0_51, %c0_52], %74 {strides = array<i32>} : memref<8x8x32xf32, #tpu.memory_space<vmem>>, vector<1x8x32xf32>,
    %c0_53 = arith.constant 0 : index
    %c0_54 = arith.constant 0 : index
    %75 = vector.load %arg6[%c0_53, %c0_54] : memref<1x32xf32, #tpu.memory_space<vmem>>, vector<1x32xf32>
    %76 = vector.shape_cast %75 : vector<1x32xf32> to vector<1x32xf32>
    %77 = vector.broadcast %76 : vector<1x32xf32> to vector<8x32xf32>
    %78 = arith.truncf %77 : vector<8x32xf32> to vector<8x32xbf16>
    %cst_55 = arith.constant dense<0.000000e+00> : vector<8x32xf32>
    %79 = tpu.matmul %78, %1, %cst_55 {dimension_numbers = #tpu.dot_dimension_numbers<[1], [0], [0], [1], [0, 0, 1, 1], [], []>} : vector<8x32xbf16>, vector<32x32xbf16>, vector<8x32xf32> -> vector<8x32xf32>
    %c0_56 = arith.constant 0 : index
    %c0_57 = arith.constant 0 : index
    %c0_58 = arith.constant 0 : index
    %80 = vector.load %arg8[%c0_56, %c0_57, %c0_58] : memref<8x8x32xf32, #tpu.memory_space<vmem>>, vector<1x8x32xf32>
    %81 = vector.shape_cast %80 : vector<1x8x32xf32> to vector<8x32xf32>
    %82 = arith.addf %79, %81 : vector<8x32xf32>
    %83 = math.tanh %82 : vector<8x32xf32>
    %84 = arith.truncf %83 : vector<8x32xf32> to vector<8x32xbf16>
    %cst_59 = arith.constant dense<0.000000e+00> : vector<8x32xf32>
    %85 = tpu.matmul %84, %1, %cst_59 {dimension_numbers = #tpu.dot_dimension_numbers<[1], [0], [0], [1], [0, 0, 1, 1], [], []>} : vector<8x32xbf16>, vector<32x32xbf16>, vector<8x32xf32> -> vector<8x32xf32>
    %c1_60 = arith.constant 1 : index
    %c0_61 = arith.constant 0 : index
    %c0_62 = arith.constant 0 : index
    %86 = vector.load %arg8[%c1_60, %c0_61, %c0_62] : memref<8x8x32xf32, #tpu.memory_space<vmem>>, vector<1x8x32xf32>
    %87 = vector.shape_cast %86 : vector<1x8x32xf32> to vector<8x32xf32>
    %88 = arith.addf %85, %87 : vector<8x32xf32>
    %89 = math.tanh %88 : vector<8x32xf32>
    %90 = arith.truncf %89 : vector<8x32xf32> to vector<8x32xbf16>
    %cst_63 = arith.constant dense<0.000000e+00> : vector<8x32xf32>
    %91 = tpu.matmul %90, %1, %cst_63 {dimension_numbers = #tpu.dot_dimension_numbers<[1], [0], [0], [1], [0, 0, 1, 1], [], []>} : vector<8x32xbf16>, vector<32x32xbf16>, vector<8x32xf32> -> vector<8x32xf32>
    %c2_64 = arith.constant 2 : index
    %c0_65 = arith.constant 0 : index
    %c0_66 = arith.constant 0 : index
    %92 = vector.load %arg8[%c2_64, %c0_65, %c0_66] : memref<8x8x32xf32, #tpu.memory_space<vmem>>, vector<1x8x32xf32>
    %93 = vector.shape_cast %92 : vector<1x8x32xf32> to vector<8x32xf32>
    %94 = arith.addf %91, %93 : vector<8x32xf32>
    %95 = math.tanh %94 : vector<8x32xf32>
    %96 = arith.truncf %95 : vector<8x32xf32> to vector<8x32xbf16>
    %cst_67 = arith.constant dense<0.000000e+00> : vector<8x32xf32>
    %97 = tpu.matmul %96, %1, %cst_67 {dimension_numbers = #tpu.dot_dimension_numbers<[1], [0], [0], [1], [0, 0, 1, 1], [], []>} : vector<8x32xbf16>, vector<32x32xbf16>, vector<8x32xf32> -> vector<8x32xf32>
    %c3_68 = arith.constant 3 : index
    %c0_69 = arith.constant 0 : index
    %c0_70 = arith.constant 0 : index
    %98 = vector.load %arg8[%c3_68, %c0_69, %c0_70] : memref<8x8x32xf32, #tpu.memory_space<vmem>>, vector<1x8x32xf32>
    %99 = vector.shape_cast %98 : vector<1x8x32xf32> to vector<8x32xf32>
    %100 = arith.addf %97, %99 : vector<8x32xf32>
    %101 = math.tanh %100 : vector<8x32xf32>
    %102 = arith.truncf %101 : vector<8x32xf32> to vector<8x32xbf16>
    %cst_71 = arith.constant dense<0.000000e+00> : vector<8x32xf32>
    %103 = tpu.matmul %102, %1, %cst_71 {dimension_numbers = #tpu.dot_dimension_numbers<[1], [0], [0], [1], [0, 0, 1, 1], [], []>} : vector<8x32xbf16>, vector<32x32xbf16>, vector<8x32xf32> -> vector<8x32xf32>
    %c4_72 = arith.constant 4 : index
    %c0_73 = arith.constant 0 : index
    %c0_74 = arith.constant 0 : index
    %104 = vector.load %arg8[%c4_72, %c0_73, %c0_74] : memref<8x8x32xf32, #tpu.memory_space<vmem>>, vector<1x8x32xf32>
    %105 = vector.shape_cast %104 : vector<1x8x32xf32> to vector<8x32xf32>
    %106 = arith.addf %103, %105 : vector<8x32xf32>
    %107 = math.tanh %106 : vector<8x32xf32>
    %108 = arith.truncf %107 : vector<8x32xf32> to vector<8x32xbf16>
    %cst_75 = arith.constant dense<0.000000e+00> : vector<8x32xf32>
    %109 = tpu.matmul %108, %1, %cst_75 {dimension_numbers = #tpu.dot_dimension_numbers<[1], [0], [0], [1], [0, 0, 1, 1], [], []>} : vector<8x32xbf16>, vector<32x32xbf16>, vector<8x32xf32> -> vector<8x32xf32>
    %c5_76 = arith.constant 5 : index
    %c0_77 = arith.constant 0 : index
    %c0_78 = arith.constant 0 : index
    %110 = vector.load %arg8[%c5_76, %c0_77, %c0_78] : memref<8x8x32xf32, #tpu.memory_space<vmem>>, vector<1x8x32xf32>
    %111 = vector.shape_cast %110 : vector<1x8x32xf32> to vector<8x32xf32>
    %112 = arith.addf %109, %111 : vector<8x32xf32>
    %113 = math.tanh %112 : vector<8x32xf32>
    %114 = arith.truncf %113 : vector<8x32xf32> to vector<8x32xbf16>
    %cst_79 = arith.constant dense<0.000000e+00> : vector<8x32xf32>
    %115 = tpu.matmul %114, %1, %cst_79 {dimension_numbers = #tpu.dot_dimension_numbers<[1], [0], [0], [1], [0, 0, 1, 1], [], []>} : vector<8x32xbf16>, vector<32x32xbf16>, vector<8x32xf32> -> vector<8x32xf32>
    %c6_80 = arith.constant 6 : index
    %c0_81 = arith.constant 0 : index
    %c0_82 = arith.constant 0 : index
    %116 = vector.load %arg8[%c6_80, %c0_81, %c0_82] : memref<8x8x32xf32, #tpu.memory_space<vmem>>, vector<1x8x32xf32>
    %117 = vector.shape_cast %116 : vector<1x8x32xf32> to vector<8x32xf32>
    %118 = arith.addf %115, %117 : vector<8x32xf32>
    %119 = math.tanh %118 : vector<8x32xf32>
    %120 = arith.truncf %119 : vector<8x32xf32> to vector<8x32xbf16>
    %cst_83 = arith.constant dense<0.000000e+00> : vector<8x32xf32>
    %121 = tpu.matmul %120, %1, %cst_83 {dimension_numbers = #tpu.dot_dimension_numbers<[1], [0], [0], [1], [0, 0, 1, 1], [], []>} : vector<8x32xbf16>, vector<32x32xbf16>, vector<8x32xf32> -> vector<8x32xf32>
    %c7_84 = arith.constant 7 : index
    %c0_85 = arith.constant 0 : index
    %c0_86 = arith.constant 0 : index
    %122 = vector.load %arg8[%c7_84, %c0_85, %c0_86] : memref<8x8x32xf32, #tpu.memory_space<vmem>>, vector<1x8x32xf32>
    %123 = vector.shape_cast %122 : vector<1x8x32xf32> to vector<8x32xf32>
    %124 = arith.addf %121, %123 : vector<8x32xf32>
    %125 = math.tanh %124 : vector<8x32xf32>
    %c0_87 = arith.constant 0 : index
    %c0_88 = arith.constant 0 : index
    %126 = vector.load %arg4[%c0_87, %c0_88] : memref<32x128xf32, #tpu.memory_space<vmem>>, vector<32x128xf32>
    %cst_89 = arith.constant dense<0.000000e+00> : vector<8x128xf32>
    %127 = tpu.matmul %125, %126, %cst_89 {dimension_numbers = #tpu.dot_dimension_numbers<[1], [0], [0], [1], [0, 0, 1, 1], [], []>} : vector<8x32xf32>, vector<32x128xf32>, vector<8x128xf32> -> vector<8x128xf32>
    %128 = tpu.iota {dimensions = array<i32: 1>} : vector<8x128xi32>
    %c8_i32 = arith.constant 8 : i32
    %129 = vector.broadcast %c8_i32 : i32 to vector<8x128xi32>
    %130 = arith.cmpi slt, %128, %129 : vector<8x128xi32>
    %cst_90 = arith.constant -1.000000e+30 : f32
    %131 = vector.broadcast %cst_90 : f32 to vector<8x128xf32>
    %132 = arith.select %130, %127, %131 : vector<8x128xi1>, vector<8x128xf32>
    %cst_91 = arith.constant dense<0xFF800000> : vector<8xf32>
    %133 = vector.multi_reduction <maximumf>, %132, %cst_91 [1] : vector<8x128xf32> to vector<8xf32>
    %134 = vector.shape_cast %133 : vector<8xf32> to vector<8x1xf32>
    %135 = vector.broadcast %134 : vector<8x1xf32> to vector<8x128xf32>
    %136 = arith.subf %132, %135 : vector<8x128xf32>
    %137 = math.exp %136 : vector<8x128xf32>
    %cst_92 = arith.constant 0.000000e+00 : f32
    %138 = vector.broadcast %cst_92 : f32 to vector<8x128xf32>
    %139 = arith.select %130, %137, %138 : vector<8x128xi1>, vector<8x128xf32>
    %cst_93 = arith.constant dense<0.000000e+00> : vector<8xf32>
    %140 = vector.multi_reduction <add>, %139, %cst_93 [1] : vector<8x128xf32> to vector<8xf32>
    %141 = vector.shape_cast %140 : vector<8xf32> to vector<8x1xf32>
    %142 = vector.broadcast %141 : vector<8x1xf32> to vector<8x128xf32>
    %143 = arith.divf %139, %142 : vector<8x128xf32>
    %c0_94 = arith.constant 0 : index
    %c0_95 = arith.constant 0 : index
    %144 = vector.load %arg7[%c0_94, %c0_95] : memref<8x128xf32, #tpu.memory_space<vmem>>, vector<8x128xf32>
    tpu.vector_store %arg7[%c0_94, %c0_95], %143 {strides = array<i32>} : memref<8x128xf32, #tpu.memory_space<vmem>>, vector<8x128xf32>,
    return
  }
  func.func @transform_0(%arg0: i32) -> (i32, i32, i32) {
    %c0_i32 = arith.constant 0 : i32
    %c0_i32_0 = arith.constant 0 : i32
    %c0_i32_1 = arith.constant 0 : i32
    return %arg0, %c0_i32, %c0_i32_0 : i32, i32, i32
  }
  func.func @transform_1(%arg0: i32) -> (i32, i32) {
    %c0_i32 = arith.constant 0 : i32
    %c0_i32_0 = arith.constant 0 : i32
    %c0_i32_1 = arith.constant 0 : i32
    return %c0_i32, %c0_i32_0 : i32, i32
  }
  func.func @transform_2(%arg0: i32) -> (i32, i32) {
    %c0_i32 = arith.constant 0 : i32
    %c0_i32_0 = arith.constant 0 : i32
    %c0_i32_1 = arith.constant 0 : i32
    return %c0_i32, %c0_i32_0 : i32, i32
  }
  func.func @transform_3(%arg0: i32) -> (i32, i32) {
    %c0_i32 = arith.constant 0 : i32
    %c0_i32_0 = arith.constant 0 : i32
    %c0_i32_1 = arith.constant 0 : i32
    return %c0_i32, %c0_i32_0 : i32, i32
  }
  func.func @transform_4(%arg0: i32) -> (i32, i32) {
    %c0_i32 = arith.constant 0 : i32
    %c0_i32_0 = arith.constant 0 : i32
    %c0_i32_1 = arith.constant 0 : i32
    return %c0_i32, %c0_i32_0 : i32, i32
  }
  func.func @transform_5(%arg0: i32) -> (i32, i32) {
    %c0_i32 = arith.constant 0 : i32
    %c0_i32_0 = arith.constant 0 : i32
    %c0_i32_1 = arith.constant 0 : i32
    return %c0_i32, %c0_i32_0 : i32, i32
  }
  func.func @transform_6(%arg0: i32) -> (i32, i32) {
    %c0_i32 = arith.constant 0 : i32
    %c0_i32_0 = arith.constant 0 : i32
    return %arg0, %c0_i32 : i32, i32
  }
}

</mosaic_0001>

<llo_original>
// kernel: tpu_custom_call.1
$region0: #{tpu_custom_call.1}
  #allocation0 [shape = 'u32[]', space=smem, size = 0x4, offset = 0x4, fixed_abs, tag = 'smem constant byte address 0x4 - core index']
  #allocation1 [shape = 'u32[144,128]{1,0:T(1,128)}', space=vmem, size = 0x12000, scoped, tag = 'internal scratch']
  #allocation2 [shape = 'f32[8,8,32]{2,1,0:T(8,128)}', space=vmem, size = 0x8000, scoped, tag = 'scratch operand']
  %s0 = inlined_call_operand.hbm [shape: f32[16,8,64], index: 0, kind: input, shape index: {}]
  %s1 = inlined_call_operand.vmem [shape: bf16[64,32], index: 1, kind: input, shape index: {}]
  %s2 = inlined_call_operand.vmem [shape: bf16[32,32], index: 2, kind: input, shape index: {}]
  %s3 = inlined_call_operand.vmem [shape: f32[32,128], index: 3, kind: input, shape index: {}]
  %s4 = inlined_call_operand.vmem [shape: f32[1,32], index: 4, kind: input, shape index: {}]
  %s5 = inlined_call_operand.vmem [shape: f32[1,32], index: 5, kind: input, shape index: {}]
  %s6 = inlined_call_operand.hbm [shape: f32[16,128], index: 6, kind: output, shape index: {}]
  %s7 = sld [smem:[#allocation0]]
  $region61: #{tpu_custom_call.1} parent=0
    _
  %s9 = ssub.s32 1, %s7
  %s10 = scalar_select 0, %s9, %s7
  $region1: #{tpu_custom_call.1} parent=0
    #allocation3 [shape = 'u8[65536]{0}', space=vmem, size = 0x10000, scoped, tag = 'input window, operand 0']
    #allocation4 [shape = 's32[2]{0}', space=sflag, size = 0x8, scoped, tag = 'scoped memory for tpu_custom_call.1']
    #allocation5 [shape = 's32[2]{0}', space=sflag, size = 0x8, scoped, tag = 'scoped memory for tpu_custom_call.1']
    #allocation6 [shape = 'u8[8192]{0}', space=vmem, size = 0x2000, scoped, tag = 'output window, operand 0']
    %11 = vsyncpa [#allocation4], 0
    %s12 = scalar_lea.sflag [#allocation4], 1
    %13 = vsyncpa %s12, 0
    %14 = vsyncpa [#allocation5], 0
    %s15 = scalar_lea.sflag [#allocation5], 1
    %16 = vsyncpa %s15, 0
    loop: start=0, step=1, limit=4
    $region2: #{tpu_custom_call.1} parent=1 // loop_pre_header
      _
    $region3: #{tpu_custom_call.1} parent=1 // loop_header
      %s18 = sphi 0, %s22
      %p19 = scmp.ge.s32.totalorder %s18, 4
      %s28 = sphi 0, %s30
      %s31 = sphi 0, %s28
      %s32 = sphi 0, %s31
      %s48 = sphi 0, %s32
      %s52 = sphi 0, %s52
      %s54 = sphi 0, %s52
      %s55 = sphi 0, %s54
      %s69 = sphi 0, %s55
      %s73 = sphi 0, %s73
      %s75 = sphi 0, %s73
      %s76 = sphi 0, %s75
      %s90 = sphi 0, %s76
      %s94 = sphi 0, %s94
      %s96 = sphi 0, %s94
      %s97 = sphi 0, %s96
      %s111 = sphi 0, %s97
      %s115 = sphi 0, %s115
      %s117 = sphi 0, %s115
      %s118 = sphi 0, %s117
      %s132 = sphi 0, %s118
      %s136 = sphi 0, %s136
      %s138 = sphi 0, %s136
      %s139 = sphi 0, %s138
      %s153 = sphi 0, %s139
      %s159 = sphi 0, %s161
      %s162 = sphi 0, %s159
      %s163 = sphi 0, %s162
      %s179 = sphi 0, %s163
    $region4: #{tpu_custom_call.1} parent=1 // loop_header_branch
      %21 = sbr.rel (%p19) target = $region8
    $region5: #{tpu_custom_call.1} parent=1 // loop_body
      %s23 = ssub.s32 %s18, 1
      %s24 = ssub.s32 %s18, 2
      %s25 = sadd.s32 %s18, 1
      %s26 = ssub.s32 %s18, %s25
      %p27 = scmp.eq.s32.totalorder %s26, 0
      %s29 = sadd.s32 %s28, 1
      %s30 = scalar_select %p27, %s28, %s29
      %p33 = pneg %p27
      %p34 = scmp.eq.s32.totalorder %s18, 1
      %p35 = por %p33, %p34
      %p36 = scmp.ne.s32.totalorder %s28, %s31
      %p37 = scmp.eq.s32.totalorder %s18, 0
      %p38 = por %p36, %p37
      %p39 = scmp.ne.s32.totalorder %s28, %s31
      %p40 = scmp.eq.s32.totalorder %s23, 1
      %p41 = por %p39, %p40
      %p42 = scmp.ne.s32.totalorder %s31, %s32
      %p43 = scmp.eq.s32.totalorder %s23, 0
      %p44 = por %p42, %p43
      %p45 = scmp.ne.s32.totalorder %s31, %s32
      %p46 = scmp.eq.s32.totalorder %s24, 1
      %p47 = por %p45, %p46
      %p49 = scmp.ne.s32.totalorder %s32, %s48
      %p50 = scmp.eq.s32.totalorder %s24, 0
      %p51 = por %p49, %p50
      %s53 = sadd.s32 %s52, 1
      %p56 = scmp.eq.s32.totalorder %s18, 1
      %p57 = scmp.ne.s32.totalorder %s52, %s54
      %p58 = scmp.eq.s32.totalorder %s18, 0
      %p59 = por %p57, %p58
      %p60 = scmp.ne.s32.totalorder %s52, %s54
      %p61 = scmp.eq.s32.totalorder %s23, 1
      %p62 = por %p60, %p61
      %p63 = scmp.ne.s32.totalorder %s54, %s55
      %p64 = scmp.eq.s32.totalorder %s23, 0
      %p65 = por %p63, %p64
      %p66 = scmp.ne.s32.totalorder %s54, %s55
      %p67 = scmp.eq.s32.totalorder %s24, 1
      %p68 = por %p66, %p67
      %p70 = scmp.ne.s32.totalorder %s55, %s69
      %p71 = scmp.eq.s32.totalorder %s24, 0
      %p72 = por %p70, %p71
      %s74 = sadd.s32 %s73, 1
      %p77 = scmp.eq.s32.totalorder %s18, 1
      %p78 = scmp.ne.s32.totalorder %s73, %s75
      %p79 = scmp.eq.s32.totalorder %s18, 0
      %p80 = por %p78, %p79
      %p81 = scmp.ne.s32.totalorder %s73, %s75
      %p82 = scmp.eq.s32.totalorder %s23, 1
      %p83 = por %p81, %p82
      %p84 = scmp.ne.s32.totalorder %s75, %s76
      %p85 = scmp.eq.s32.totalorder %s23, 0
      %p86 = por %p84, %p85
      %p87 = scmp.ne.s32.totalorder %s75, %s76
      %p88 = scmp.eq.s32.totalorder %s24, 1
      %p89 = por %p87, %p88
      %p91 = scmp.ne.s32.totalorder %s76, %s90
      %p92 = scmp.eq.s32.totalorder %s24, 0
      %p93 = por %p91, %p92
      %s95 = sadd.s32 %s94, 1
      %p98 = scmp.eq.s32.totalorder %s18, 1
      %p99 = scmp.ne.s32.totalorder %s94, %s96
      %p100 = scmp.eq.s32.totalorder %s18, 0
      %p101 = por %p99, %p100
      %p102 = scmp.ne.s32.totalorder %s94, %s96
      %p103 = scmp.eq.s32.totalorder %s23, 1
      %p104 = por %p102, %p103
      %p105 = scmp.ne.s32.totalorder %s96, %s97
      %p106 = scmp.eq.s32.totalorder %s23, 0
      %p107 = por %p105, %p106
      %p108 = scmp.ne.s32.totalorder %s96, %s97
      %p109 = scmp.eq.s32.totalorder %s24, 1
      %p110 = por %p108, %p109
      %p112 = scmp.ne.s32.totalorder %s97, %s111
      %p113 = scmp.eq.s32.totalorder %s24, 0
      %p114 = por %p112, %p113
      %s116 = sadd.s32 %s115, 1
      %p119 = scmp.eq.s32.totalorder %s18, 1
      %p120 = scmp.ne.s32.totalorder %s115, %s117
      %p121 = scmp.eq.s32.totalorder %s18, 0
      %p122 = por %p120, %p121
      %p123 = scmp.ne.s32.totalorder %s115, %s117
      %p124 = scmp.eq.s32.totalorder %s23, 1
      %p125 = por %p123, %p124
      %p126 = scmp.ne.s32.totalorder %s117, %s118
      %p127 = scmp.eq.s32.totalorder %s23, 0
      %p128 = por %p126, %p127
      %p129 = scmp.ne.s32.totalorder %s117, %s118
      %p130 = scmp.eq.s32.totalorder %s24, 1
      %p131 = por %p129, %p130
      %p133 = scmp.ne.s32.totalorder %s118, %s132
      %p134 = scmp.eq.s32.totalorder %s24, 0
      %p135 = por %p133, %p134
      %s137 = sadd.s32 %s136, 1
      %p140 = scmp.eq.s32.totalorder %s18, 1
      %p141 = scmp.ne.s32.totalorder %s136, %s138
      %p142 = scmp.eq.s32.totalorder %s18, 0
      %p143 = por %p141, %p142
      %p144 = scmp.ne.s32.totalorder %s136, %s138
      %p145 = scmp.eq.s32.totalorder %s23, 1
      %p146 = por %p144, %p145
      %p147 = scmp.ne.s32.totalorder %s138, %s139
      %p148 = scmp.eq.s32.totalorder %s23, 0
      %p149 = por %p147, %p148
      %p150 = scmp.ne.s32.totalorder %s138, %s139
      %p151 = scmp.eq.s32.totalorder %s24, 1
      %p152 = por %p150, %p151
      %p154 = scmp.ne.s32.totalorder %s139, %s153
      %p155 = scmp.eq.s32.totalorder %s24, 0
      %p156 = por %p154, %p155
      %s157 = ssub.s32 %s18, %s25
      %p158 = scmp.eq.s32.totalorder %s157, 0
      %s160 = sadd.s32 %s159, 1
      %s161 = scalar_select %p158, %s159, %s160
      %p164 = pneg %p158
      %p165 = scmp.eq.s32.totalorder %s18, 1
      %p166 = por %p164, %p165
      %p167 = scmp.ne.s32.totalorder %s159, %s162
      %p168 = scmp.eq.s32.totalorder %s18, 0
      %p169 = por %p167, %p168
      %p170 = scmp.ne.s32.totalorder %s159, %s162
      %p171 = scmp.eq.s32.totalorder %s23, 1
      %p172 = por %p170, %p171
      %p173 = scmp.ne.s32.totalorder %s162, %s163
      %p174 = scmp.eq.s32.totalorder %s23, 0
      %p175 = por %p173, %p174
      %p176 = scmp.ne.s32.totalorder %s162, %s163
      %p177 = scmp.eq.s32.totalorder %s24, 1
      %p178 = por %p176, %p177
      %p180 = scmp.ne.s32.totalorder %s163, %s179
      %p181 = scmp.eq.s32.totalorder %s24, 0
      %p182 = por %p180, %p181
      %p183 = scmp.le.s32.totalorder 1, %s18
      %p184 = scmp.lt.s32.totalorder %s18, 3
      %p185 = pnand %p183, %p184
      %p186 = pneg %p185
      // Predicated region
      $region9: #{tpu_custom_call.1} parent=5 // pred_check
        _
      $region10: #{tpu_custom_call.1} parent=5 // pred_check_branch
        %188 = sbr.rel (%p185) target = $region12
      $region11: #{tpu_custom_call.1} parent=5 // pred_region
        %s189 = ssub.s32 %s18, 1
        // Predicated region
        $region13: #{tpu_custom_call.1} parent=11 // pred_check
          %p190 = pneg %p65
        $region14: #{tpu_custom_call.1} parent=11 // pred_check_branch
          %192 = sbr.rel (%p190) target = $region16
        $region15: #{tpu_custom_call.1} parent=11 // pred_region
          _
        $region16: #{tpu_custom_call.1} parent=11 // pred_fallthru
          _
        // Predicated region
        $region17: #{tpu_custom_call.1} parent=11 // pred_check
          %p193 = pneg %p86
        $region18: #{tpu_custom_call.1} parent=11 // pred_check_branch
          %195 = sbr.rel (%p193) target = $region20
        $region19: #{tpu_custom_call.1} parent=11 // pred_region
          _
        $region20: #{tpu_custom_call.1} parent=11 // pred_fallthru
          _
        // Predicated region
        $region21: #{tpu_custom_call.1} parent=11 // pred_check
          %p196 = pneg %p107
        $region22: #{tpu_custom_call.1} parent=11 // pred_check_branch
          %198 = sbr.rel (%p196) target = $region24
        $region23: #{tpu_custom_call.1} parent=11 // pred_region
          _
        $region24: #{tpu_custom_call.1} parent=11 // pred_fallthru
          _
        // Predicated region
        $region25: #{tpu_custom_call.1} parent=11 // pred_check
          %p199 = pneg %p128
        $region26: #{tpu_custom_call.1} parent=11 // pred_check_branch
          %201 = sbr.rel (%p199) target = $region28
        $region27: #{tpu_custom_call.1} parent=11 // pred_region
          _
        $region28: #{tpu_custom_call.1} parent=11 // pred_fallthru
          _
        // Predicated region
        $region29: #{tpu_custom_call.1} parent=11 // pred_check
          %p202 = pneg %p149
        $region30: #{tpu_custom_call.1} parent=11 // pred_check_branch
          %204 = sbr.rel (%p202) target = $region32
        $region31: #{tpu_custom_call.1} parent=11 // pred_region
          _
        $region32: #{tpu_custom_call.1} parent=11 // pred_fallthru
          _
      $region12: #{tpu_custom_call.1} parent=5 // pred_fallthru
        _
      %p205 = scmp.lt.s32.totalorder %s18, 2
      // Predicated region
      $region33: #{tpu_custom_call.1} parent=5 // pred_check
        %p206 = pneg %p205
      $region34: #{tpu_custom_call.1} parent=5 // pred_check_branch
        %208 = sbr.rel (%p206) target = $region36
      $region35: #{tpu_custom_call.1} parent=5 // pred_region
        // Predicated region
        $region37: #{tpu_custom_call.1} parent=35 // pred_check
          %p209 = pneg %p38
        $region38: #{tpu_custom_call.1} parent=35 // pred_check_branch
          %211 = sbr.rel (%p209) target = $region40
        $region39: #{tpu_custom_call.1} parent=35 // pred_region
          %s212 = sand.u32 %s28, 1
          %s213 = scalar_lea.sflag [#allocation4], %s212
          %s214 = sand.u32 %s28, 1
          %s215 = smul.addr %s214, 64
          %s216 = scalar_lea.vmem [#allocation3], %s215
          %s217 = smul.u32 8, %s18
          %s219 = ssub.s32 1024, 1024
          %220 = vsyncadd %s213, %s219
          %s221 = smul.addr %s217, 128
          %s222 = scalar_lea.hbm %s0, %s221
          %s223 = sshll.u32 %s216, 4
          %s224 = int_to_ptr.vmem [resolvable:$true] %s223
          %229 = dma.hbm_to_vmem [thread:$0]  %s222, 1024, %s224, %s213, 128, 128, 8
        $region40: #{tpu_custom_call.1} parent=35 // pred_fallthru
          _
      $region36: #{tpu_custom_call.1} parent=5 // pred_fallthru
        _
      %p230 = scmp.le.s32.totalorder 1, %s18
      %p231 = scmp.lt.s32.totalorder %s18, 3
      %p232 = pnand %p230, %p231
      %p233 = pneg %p232
      // Predicated region
      $region41: #{tpu_custom_call.1} parent=5 // pred_check
        _
      $region42: #{tpu_custom_call.1} parent=5 // pred_check_branch
        %235 = sbr.rel (%p232) target = $region44
      $region43: #{tpu_custom_call.1} parent=5 // pred_region
        %s236 = ssub.s32 %s18, 1
        %s237 = sand.u32 %s31, 1
        %s238 = scalar_lea.sflag [#allocation4], %s237
        %s239 = sand.u32 %s31, 1
        %s240 = smul.addr %s239, 64
        %s241 = scalar_lea.vmem [#allocation3], %s240
        // Predicated region
        $region45: #{tpu_custom_call.1} parent=43 // pred_check
          %p242 = pneg %p44
        $region46: #{tpu_custom_call.1} parent=43 // pred_check_branch
          %244 = sbr.rel (%p242) target = $region48
        $region47: #{tpu_custom_call.1} parent=43 // pred_region
          %245 = dma.done %s238, 1024
        $region48: #{tpu_custom_call.1} parent=43 // pred_fallthru
          _
        %s246 = sand.u32 %s31, 1
        %s247 = scalar_lea.sflag [#allocation4], %s246
        %s248 = sand.u32 %s31, 1
        %s249 = smul.addr %s248, 64
        %s250 = scalar_lea.vmem [#allocation3], %s249
        %p251 = pneg %p44
        %p252 = pneg %p41
        %p253 = pneg %p65
        %p254 = pneg %p62
        %p255 = pneg %p86
        %p256 = pneg %p83
        %p257 = pneg %p107
        %p258 = pneg %p104
        %p259 = pneg %p128
        %p260 = pneg %p125
        %p261 = pneg %p149
        %p262 = pneg %p146
        %p263 = pneg %p175
        %p264 = pneg %p172
        %s265 = sand.u32 %s162, 1
        %s266 = scalar_lea.sflag [#allocation5], %s265
        %s267 = sand.u32 %s162, 1
        %s268 = smul.addr %s267, 8
        %s269 = scalar_lea.vmem [#allocation6], %s268
        %s270 = smul.u32 8, %s23
        %v272 = vld [vmem:[%s1] sm:$0xf]
        %v273 = vld [vmem:[%s1 + $0x4] sm:$0xf]
        %v274 = vld [vmem:[%s1 + $0x8] sm:$0xf]
        %v275 = vld [vmem:[%s1 + $0xc] sm:$0xf]
        %v276 = vld [vmem:[%s1 + $0x10] sm:$0xf]
        %v277 = vld [vmem:[%s1 + $0x14] sm:$0xf]
        %v278 = vld [vmem:[%s1 + $0x18] sm:$0xf]
        %v279 = vld [vmem:[%s1 + $0x1c] sm:$0xf]
        %v280 = vld [vmem:[%s2] sm:$0xf]
        %v281 = vld [vmem:[%s2 + $0x4] sm:$0xf]
        %v282 = vld [vmem:[%s2 + $0x8] sm:$0xf]
        %v283 = vld [vmem:[%s2 + $0xc] sm:$0xf]
        %v284 = vld [vmem:[%s4] sm:$0x1]
        %v285 = vld [vmem:[%s241] sm:$0x1]
        %v286 = vld [vmem:[%s241 + $0x8] sm:$0x1]
        %v287 = vld [vmem:[%s241 + $0x10] sm:$0x1]
        %v288 = vld [vmem:[%s241 + $0x18] sm:$0x1]
        %v289 = vld [vmem:[%s241 + $0x20] sm:$0x1]
        %v290 = vld [vmem:[%s241 + $0x28] sm:$0x1]
        %v291 = vld [vmem:[%s241 + $0x30] sm:$0x1]
        %v292 = vld [vmem:[%s241 + $0x38] sm:$0x1]
        %v293 = vpack.c.bf16 %v285, %v285
        %v294 = vpack.c.bf16 %v286, %v286
        %v295 = vpack.c.bf16 %v287, %v287
        %v296 = vpack.c.bf16 %v288, %v288
        %v297 = vpack.c.bf16 %v289, %v289
        %v298 = vpack.c.bf16 %v290, %v290
        %v299 = vpack.c.bf16 %v291, %v291
        %v300 = vpack.c.bf16 %v292, %v292
        %v302 = vlaneseq
        %v303 = vshrl.u32 %v302, 7
        %v304 = vsub.s32 0, %v303
        %v305 = vrot.slane %v284, %v304
        %v315 = vunpack.c.l.b16 %v293
        %v316 = vunpack.c.l.b16 %v294
        %v317 = vunpack.c.l.b16 %v295
        %v318 = vunpack.c.l.b16 %v296
        %v319 = vunpack.c.l.b16 %v297
        %v320 = vunpack.c.l.b16 %v298
        %v321 = vunpack.c.l.b16 %v299
        %v322 = vunpack.c.l.b16 %v300
        %v323 = vrot.slane %v316, 7
        %vm324 = vcmask 1041409
        %v325 = vsel %vm324, %v323, %v315
        %v326 = vrot.slane %v317, 6
        %vm327 = vcmask 1042434
        %v328 = vsel %vm327, %v326, %v325
        %v329 = vrot.slane %v318, 5
        %vm330 = vcmask 1043459
        %v331 = vsel %vm330, %v329, %v328
        %v332 = vrot.slane %v319, 4
        %vm333 = vcmask 1044484
        %v334 = vsel %vm333, %v332, %v331
        %v335 = vrot.slane %v320, 3
        %vm336 = vcmask 1045509
        %v337 = vsel %vm336, %v335, %v334
        %v338 = vrot.slane %v321, 2
        %vm339 = vcmask 1046534
        %v340 = vsel %vm339, %v338, %v337
        %v341 = vrot.slane %v322, 1
        %vm342 = vcmask 1047559
        %v343 = vsel %vm342, %v341, %v340
        %v344 = vpack.c.b16 %v343, %v343
        %v353 = vunpack.c.l.b16 %v272
        %v354 = vunpack.c.l.b16 %v273
        %v355 = vunpack.c.l.b16 %v274
        %v356 = vunpack.c.l.b16 %v275
        %v357 = vunpack.c.l.b16 %v276
        %v358 = vunpack.c.l.b16 %v277
        %v359 = vunpack.c.l.b16 %v278
        %v360 = vunpack.c.l.b16 %v279
        %v361 = vpack.c.b16 %v354, %v353
        %v362 = vpack.c.b16 %v356, %v355
        %v363 = vpack.c.b16 %v358, %v357
        %v364 = vpack.c.b16 %v360, %v359
        %vm369 = vcmask 523264
        %v371 = vsel %vm369, %v344, 0
        %373 = vmatprep.subr.bf16.mxu0 0
        %374 = vmatpush1.bf16.msra.mxu0 %v361
        %375 = vmatprep.subr.bf16.mxu0 0
        %376 = vmatpush1.bf16.msra.mxu0 %v362
        %377 = vmatprep.subr.bf16.mxu0 0
        %378 = vmatpush1.bf16.msra.mxu0 %v363
        %379 = vmatprep.subr.bf16.mxu0 0
        %380 = vmatpush1.bf16.msra.mxu0 %v364
        %381 = vmatprep.subr.bf16.mxu0 0
        %382 = vmatpush1.bf16.msra.mxu0 0
        %383 = vmatprep.subr.bf16.mxu0 0
        %384 = vmatpush1.bf16.msra.mxu0 0
        %385 = vmatprep.subr.bf16.mxu0 0
        %386 = vmatpush1.bf16.msra.mxu0 0
        %387 = vmatprep.subr.bf16.mxu0 0
        %388 = vmatpush1.bf16.msra.mxu0 0
        %389 = vmatprep.subr.bf16.mxu0 0
        %390 = vmatpush1.bf16.msra.mxu0 0
        %391 = vmatprep.subr.bf16.mxu0 0
        %392 = vmatpush1.bf16.msra.mxu0 0
        %393 = vmatprep.subr.bf16.mxu0 0
        %394 = vmatpush1.bf16.msra.mxu0 0
        %395 = vmatprep.subr.bf16.mxu0 0
        %396 = vmatpush1.bf16.msra.mxu0 0
        %397 = vmatprep.subr.bf16.mxu0 0
        %398 = vmatpush1.bf16.msra.mxu0 0
        %399 = vmatprep.subr.bf16.mxu0 0
        %400 = vmatpush1.bf16.msra.mxu0 0
        %401 = vmatprep.subr.bf16.mxu0 0
        %402 = vmatpush1.bf16.msra.mxu0 0
        %403 = vmatprep.subr.bf16.mxu0 0
        %404 = vmatpush1.bf16.msra.mxu0 0
        %405 = vmatprep.mubr.bf16.mxu0 0
        %406 = vmatmul.mubr.bf16.gmra.mrb[0].mxu0 %v371
        %v407 = vpop.f32.mrb[0].mxu0
        %v408 = vadd.f32 %v305, %v407
        %v409 = vpop.f32.mrb[0].mxu0
        %v410 = vpop.f32.mrb[0].mxu0
        %v411 = vpop.f32.mrb[0].mxu0
        %412 = vdwg.mxu0
        %vm413 = vcmask 261120
        %414 = vst.msk [vmem:[#allocation2] sm:$0xff] %vm413, %v408
        %v415 = vld [vmem:[%s241 + $0x1] sm:$0x1]
        %v416 = vld [vmem:[%s241 + $0x9] sm:$0x1]
        %v417 = vld [vmem:[%s241 + $0x11] sm:$0x1]
        %v418 = vld [vmem:[%s241 + $0x19] sm:$0x1]
        %v419 = vld [vmem:[%s241 + $0x21] sm:$0x1]
        %v420 = vld [vmem:[%s241 + $0x29] sm:$0x1]
        %v421 = vld [vmem:[%s241 + $0x31] sm:$0x1]
        %v422 = vld [vmem:[%s241 + $0x39] sm:$0x1]
        %v423 = vpack.c.bf16 %v415, %v415
        %v424 = vpack.c.bf16 %v416, %v416
        %v425 = vpack.c.bf16 %v417, %v417
        %v426 = vpack.c.bf16 %v418, %v418
        %v427 = vpack.c.bf16 %v419, %v419
        %v428 = vpack.c.bf16 %v420, %v420
        %v429 = vpack.c.bf16 %v421, %v421
        %v430 = vpack.c.bf16 %v422, %v422
        %v439 = vunpack.c.l.b16 %v423
        %v440 = vunpack.c.l.b16 %v424
        %v441 = vunpack.c.l.b16 %v425
        %v442 = vunpack.c.l.b16 %v426
        %v443 = vunpack.c.l.b16 %v427
        %v444 = vunpack.c.l.b16 %v428
        %v445 = vunpack.c.l.b16 %v429
        %v446 = vunpack.c.l.b16 %v430
        %v447 = vrot.slane %v440, 7
        %v448 = vsel %vm324, %v447, %v439
        %v449 = vrot.slane %v441, 6
        %v450 = vsel %vm327, %v449, %v448
        %v451 = vrot.slane %v442, 5
        %v452 = vsel %vm330, %v451, %v450
        %v453 = vrot.slane %v443, 4
        %v454 = vsel %vm333, %v453, %v452
        %v455 = vrot.slane %v444, 3
        %v456 = vsel %vm336, %v455, %v454
        %v457 = vrot.slane %v445, 2
        %v458 = vsel %vm339, %v457, %v456
        %v459 = vrot.slane %v446, 1
        %v460 = vsel %vm342, %v459, %v458
        %v461 = vpack.c.b16 %v460, %v460
        %v463 = vsel %vm369, %v461, 0
        %465 = vmatprep.subr.bf16.mxu0 0
        %466 = vmatpush1.bf16.msra.mxu0 %v361
        %467 = vmatprep.subr.bf16.mxu0 0
        %468 = vmatpush1.bf16.msra.mxu0 %v362
        %469 = vmatprep.subr.bf16.mxu0 0
        %470 = vmatpush1.bf16.msra.mxu0 %v363
        %471 = vmatprep.subr.bf16.mxu0 0
        %472 = vmatpush1.bf16.msra.mxu0 %v364
        %473 = vmatprep.subr.bf16.mxu0 0
        %474 = vmatpush1.bf16.msra.mxu0 0
        %475 = vmatprep.subr.bf16.mxu0 0
        %476 = vmatpush1.bf16.msra.mxu0 0
        %477 = vmatprep.subr.bf16.mxu0 0
        %478 = vmatpush1.bf16.msra.mxu0 0
        %479 = vmatprep.subr.bf16.mxu0 0
        %480 = vmatpush1.bf16.msra.mxu0 0
        %481 = vmatprep.subr.bf16.mxu0 0
        %482 = vmatpush1.bf16.msra.mxu0 0
        %483 = vmatprep.subr.bf16.mxu0 0
        %484 = vmatpush1.bf16.msra.mxu0 0
        %485 = vmatprep.subr.bf16.mxu0 0
        %486 = vmatpush1.bf16.msra.mxu0 0
        %487 = vmatprep.subr.bf16.mxu0 0
        %488 = vmatpush1.bf16.msra.mxu0 0
        %489 = vmatprep.subr.bf16.mxu0 0
        %490 = vmatpush1.bf16.msra.mxu0 0
        %491 = vmatprep.subr.bf16.mxu0 0
        %492 = vmatpush1.bf16.msra.mxu0 0
        %493 = vmatprep.subr.bf16.mxu0 0
        %494 = vmatpush1.bf16.msra.mxu0 0
        %495 = vmatprep.subr.bf16.mxu0 0
        %496 = vmatpush1.bf16.msra.mxu0 0
        %497 = vmatprep.mubr.bf16.mxu0 0
        %498 = vmatmul.mubr.bf16.gmra.mrb[0].mxu0 %v463
        %v499 = vpop.f32.mrb[0].mxu0
        %v500 = vadd.f32 %v305, %v499
        %v501 = vpop.f32.mrb[0].mxu0
        %v502 = vpop.f32.mrb[0].mxu0
        %v503 = vpop.f32.mrb[0].mxu0
        %504 = vdwg.mxu0
        %s505 = scalar_lea.vmem [#allocation2], 8
        %506 = vst.msk [vmem:[%s505] sm:$0xff] %vm413, %v500
        %v507 = vld [vmem:[%s241 + $0x2] sm:$0x1]
        %v508 = vld [vmem:[%s241 + $0xa] sm:$0x1]
        %v509 = vld [vmem:[%s241 + $0x12] sm:$0x1]
        %v510 = vld [vmem:[%s241 + $0x1a] sm:$0x1]
        %v511 = vld [vmem:[%s241 + $0x22] sm:$0x1]
        %v512 = vld [vmem:[%s241 + $0x2a] sm:$0x1]
        %v513 = vld [vmem:[%s241 + $0x32] sm:$0x1]
        %v514 = vld [vmem:[%s241 + $0x3a] sm:$0x1]
        %v515 = vpack.c.bf16 %v507, %v507
        %v516 = vpack.c.bf16 %v508, %v508
        %v517 = vpack.c.bf16 %v509, %v509
        %v518 = vpack.c.bf16 %v510, %v510
        %v519 = vpack.c.bf16 %v511, %v511
        %v520 = vpack.c.bf16 %v512, %v512
        %v521 = vpack.c.bf16 %v513, %v513
        %v522 = vpack.c.bf16 %v514, %v514
        %v531 = vunpack.c.l.b16 %v515
        %v532 = vunpack.c.l.b16 %v516
        %v533 = vunpack.c.l.b16 %v517
        %v534 = vunpack.c.l.b16 %v518
        %v535 = vunpack.c.l.b16 %v519
        %v536 = vunpack.c.l.b16 %v520
        %v537 = vunpack.c.l.b16 %v521
        %v538 = vunpack.c.l.b16 %v522
        %v539 = vrot.slane %v532, 7
        %v540 = vsel %vm324, %v539, %v531
        %v541 = vrot.slane %v533, 6
        %v542 = vsel %vm327, %v541, %v540
        %v543 = vrot.slane %v534, 5
        %v544 = vsel %vm330, %v543, %v542
        %v545 = vrot.slane %v535, 4
        %v546 = vsel %vm333, %v545, %v544
        %v547 = vrot.slane %v536, 3
        %v548 = vsel %vm336, %v547, %v546
        %v549 = vrot.slane %v537, 2
        %v550 = vsel %vm339, %v549, %v548
        %v551 = vrot.slane %v538, 1
        %v552 = vsel %vm342, %v551, %v550
        %v553 = vpack.c.b16 %v552, %v552
        %v555 = vsel %vm369, %v553, 0
        %557 = vmatprep.subr.bf16.mxu0 0
        %558 = vmatpush1.bf16.msra.mxu0 %v361
        %559 = vmatprep.subr.bf16.mxu0 0
        %560 = vmatpush1.bf16.msra.mxu0 %v362
        %561 = vmatprep.subr.bf16.mxu0 0
        %562 = vmatpush1.bf16.msra.mxu0 %v363
        %563 = vmatprep.subr.bf16.mxu0 0
        %564 = vmatpush1.bf16.msra.mxu0 %v364
        %565 = vmatprep.subr.bf16.mxu0 0
        %566 = vmatpush1.bf16.msra.mxu0 0
        %567 = vmatprep.subr.bf16.mxu0 0
        %568 = vmatpush1.bf16.msra.mxu0 0
        %569 = vmatprep.subr.bf16.mxu0 0
        %570 = vmatpush1.bf16.msra.mxu0 0
        %571 = vmatprep.subr.bf16.mxu0 0
        %572 = vmatpush1.bf16.msra.mxu0 0
        %573 = vmatprep.subr.bf16.mxu0 0
        %574 = vmatpush1.bf16.msra.mxu0 0
        %575 = vmatprep.subr.bf16.mxu0 0
        %576 = vmatpush1.bf16.msra.mxu0 0
        %577 = vmatprep.subr.bf16.mxu0 0
        %578 = vmatpush1.bf16.msra.mxu0 0
        %579 = vmatprep.subr.bf16.mxu0 0
        %580 = vmatpush1.bf16.msra.mxu0 0
        %581 = vmatprep.subr.bf16.mxu0 0
        %582 = vmatpush1.bf16.msra.mxu0 0
        %583 = vmatprep.subr.bf16.mxu0 0
        %584 = vmatpush1.bf16.msra.mxu0 0
        %585 = vmatprep.subr.bf16.mxu0 0
        %586 = vmatpush1.bf16.msra.mxu0 0
        %587 = vmatprep.subr.bf16.mxu0 0
        %588 = vmatpush1.bf16.msra.mxu0 0
        %589 = vmatprep.mubr.bf16.mxu0 0
        %590 = vmatmul.mubr.bf16.gmra.mrb[0].mxu0 %v555
        %v591 = vpop.f32.mrb[0].mxu0
        %v592 = vadd.f32 %v305, %v591
        %v593 = vpop.f32.mrb[0].mxu0
        %v594 = vpop.f32.mrb[0].mxu0
        %v595 = vpop.f32.mrb[0].mxu0
        %596 = vdwg.mxu0
        %s597 = scalar_lea.vmem [#allocation2], 16
        %598 = vst.msk [vmem:[%s597] sm:$0xff] %vm413, %v592
        %v599 = vld [vmem:[%s241 + $0x3] sm:$0x1]
        %v600 = vld [vmem:[%s241 + $0xb] sm:$0x1]
        %v601 = vld [vmem:[%s241 + $0x13] sm:$0x1]
        %v602 = vld [vmem:[%s241 + $0x1b] sm:$0x1]
        %v603 = vld [vmem:[%s241 + $0x23] sm:$0x1]
        %v604 = vld [vmem:[%s241 + $0x2b] sm:$0x1]
        %v605 = vld [vmem:[%s241 + $0x33] sm:$0x1]
        %v606 = vld [vmem:[%s241 + $0x3b] sm:$0x1]
        %v607 = vpack.c.bf16 %v599, %v599
        %v608 = vpack.c.bf16 %v600, %v600
        %v609 = vpack.c.bf16 %v601, %v601
        %v610 = vpack.c.bf16 %v602, %v602
        %v611 = vpack.c.bf16 %v603, %v603
        %v612 = vpack.c.bf16 %v604, %v604
        %v613 = vpack.c.bf16 %v605, %v605
        %v614 = vpack.c.bf16 %v606, %v606
        %v623 = vunpack.c.l.b16 %v607
        %v624 = vunpack.c.l.b16 %v608
        %v625 = vunpack.c.l.b16 %v609
        %v626 = vunpack.c.l.b16 %v610
        %v627 = vunpack.c.l.b16 %v611
        %v628 = vunpack.c.l.b16 %v612
        %v629 = vunpack.c.l.b16 %v613
        %v630 = vunpack.c.l.b16 %v614
        %v631 = vrot.slane %v624, 7
        %v632 = vsel %vm324, %v631, %v623
        %v633 = vrot.slane %v625, 6
        %v634 = vsel %vm327, %v633, %v632
        %v635 = vrot.slane %v626, 5
        %v636 = vsel %vm330, %v635, %v634
        %v637 = vrot.slane %v627, 4
        %v638 = vsel %vm333, %v637, %v636
        %v639 = vrot.slane %v628, 3
        %v640 = vsel %vm336, %v639, %v638
        %v641 = vrot.slane %v629, 2
        %v642 = vsel %vm339, %v641, %v640
        %v643 = vrot.slane %v630, 1
        %v644 = vsel %vm342, %v643, %v642
        %v645 = vpack.c.b16 %v644, %v644
        %v647 = vsel %vm369, %v645, 0
        %649 = vmatprep.subr.bf16.mxu0 0
        %650 = vmatpush1.bf16.msra.mxu0 %v361
        %651 = vmatprep.subr.bf16.mxu0 0
        %652 = vmatpush1.bf16.msra.mxu0 %v362
        %653 = vmatprep.subr.bf16.mxu0 0
        %654 = vmatpush1.bf16.msra.mxu0 %v363
        %655 = vmatprep.subr.bf16.mxu0 0
        %656 = vmatpush1.bf16.msra.mxu0 %v364
        %657 = vmatprep.subr.bf16.mxu0 0
        %658 = vmatpush1.bf16.msra.mxu0 0
        %659 = vmatprep.subr.bf16.mxu0 0
        %660 = vmatpush1.bf16.msra.mxu0 0
        %661 = vmatprep.subr.bf16.mxu0 0
        %662 = vmatpush1.bf16.msra.mxu0 0
        %663 = vmatprep.subr.bf16.mxu0 0
        %664 = vmatpush1.bf16.msra.mxu0 0
        %665 = vmatprep.subr.bf16.mxu0 0
        %666 = vmatpush1.bf16.msra.mxu0 0
        %667 = vmatprep.subr.bf16.mxu0 0
        %668 = vmatpush1.bf16.msra.mxu0 0
        %669 = vmatprep.subr.bf16.mxu0 0
        %670 = vmatpush1.bf16.msra.mxu0 0
        %671 = vmatprep.subr.bf16.mxu0 0
        %672 = vmatpush1.bf16.msra.mxu0 0
        %673 = vmatprep.subr.bf16.mxu0 0
        %674 = vmatpush1.bf16.msra.mxu0 0
        %675 = vmatprep.subr.bf16.mxu0 0
        %676 = vmatpush1.bf16.msra.mxu0 0
        %677 = vmatprep.subr.bf16.mxu0 0
        %678 = vmatpush1.bf16.msra.mxu0 0
        %679 = vmatprep.subr.bf16.mxu0 0
        %680 = vmatpush1.bf16.msra.mxu0 0
        %681 = vmatprep.mubr.bf16.mxu0 0
        %682 = vmatmul.mubr.bf16.gmra.mrb[0].mxu0 %v647
        %v683 = vpop.f32.mrb[0].mxu0
        %v684 = vadd.f32 %v305, %v683
        %v685 = vpop.f32.mrb[0].mxu0
        %v686 = vpop.f32.mrb[0].mxu0
        %v687 = vpop.f32.mrb[0].mxu0
        %688 = vdwg.mxu0
        %s689 = scalar_lea.vmem [#allocation2], 24
        %690 = vst.msk [vmem:[%s689] sm:$0xff] %vm413, %v684
        %v691 = vld [vmem:[%s241 + $0x4] sm:$0x1]
        %v692 = vld [vmem:[%s241 + $0xc] sm:$0x1]
        %v693 = vld [vmem:[%s241 + $0x14] sm:$0x1]
        %v694 = vld [vmem:[%s241 + $0x1c] sm:$0x1]
        %v695 = vld [vmem:[%s241 + $0x24] sm:$0x1]
        %v696 = vld [vmem:[%s241 + $0x2c] sm:$0x1]
        %v697 = vld [vmem:[%s241 + $0x34] sm:$0x1]
        %v698 = vld [vmem:[%s241 + $0x3c] sm:$0x1]
        %v699 = vpack.c.bf16 %v691, %v691
        %v700 = vpack.c.bf16 %v692, %v692
        %v701 = vpack.c.bf16 %v693, %v693
        %v702 = vpack.c.bf16 %v694, %v694
        %v703 = vpack.c.bf16 %v695, %v695
        %v704 = vpack.c.bf16 %v696, %v696
        %v705 = vpack.c.bf16 %v697, %v697
        %v706 = vpack.c.bf16 %v698, %v698
        %v715 = vunpack.c.l.b16 %v699
        %v716 = vunpack.c.l.b16 %v700
        %v717 = vunpack.c.l.b16 %v701
        %v718 = vunpack.c.l.b16 %v702
        %v719 = vunpack.c.l.b16 %v703
        %v720 = vunpack.c.l.b16 %v704
        %v721 = vunpack.c.l.b16 %v705
        %v722 = vunpack.c.l.b16 %v706
        %v723 = vrot.slane %v716, 7
        %v724 = vsel %vm324, %v723, %v715
        %v725 = vrot.slane %v717, 6
        %v726 = vsel %vm327, %v725, %v724
        %v727 = vrot.slane %v718, 5
        %v728 = vsel %vm330, %v727, %v726
        %v729 = vrot.slane %v719, 4
        %v730 = vsel %vm333, %v729, %v728
        %v731 = vrot.slane %v720, 3
        %v732 = vsel %vm336, %v731, %v730
        %v733 = vrot.slane %v721, 2
        %v734 = vsel %vm339, %v733, %v732
        %v735 = vrot.slane %v722, 1
        %v736 = vsel %vm342, %v735, %v734
        %v737 = vpack.c.b16 %v736, %v736
        %v739 = vsel %vm369, %v737, 0
        %741 = vmatprep.subr.bf16.mxu0 0
        %742 = vmatpush1.bf16.msra.mxu0 %v361
        %743 = vmatprep.subr.bf16.mxu0 0
        %744 = vmatpush1.bf16.msra.mxu0 %v362
        %745 = vmatprep.subr.bf16.mxu0 0
        %746 = vmatpush1.bf16.msra.mxu0 %v363
        %747 = vmatprep.subr.bf16.mxu0 0
        %748 = vmatpush1.bf16.msra.mxu0 %v364
        %749 = vmatprep.subr.bf16.mxu0 0
        %750 = vmatpush1.bf16.msra.mxu0 0
        %751 = vmatprep.subr.bf16.mxu0 0
        %752 = vmatpush1.bf16.msra.mxu0 0
        %753 = vmatprep.subr.bf16.mxu0 0
        %754 = vmatpush1.bf16.msra.mxu0 0
        %755 = vmatprep.subr.bf16.mxu0 0
        %756 = vmatpush1.bf16.msra.mxu0 0
        %757 = vmatprep.subr.bf16.mxu0 0
        %758 = vmatpush1.bf16.msra.mxu0 0
        %759 = vmatprep.subr.bf16.mxu0 0
        %760 = vmatpush1.bf16.msra.mxu0 0
        %761 = vmatprep.subr.bf16.mxu0 0
        %762 = vmatpush1.bf16.msra.mxu0 0
        %763 = vmatprep.subr.bf16.mxu0 0
        %764 = vmatpush1.bf16.msra.mxu0 0
        %765 = vmatprep.subr.bf16.mxu0 0
        %766 = vmatpush1.bf16.msra.mxu0 0
        %767 = vmatprep.subr.bf16.mxu0 0
        %768 = vmatpush1.bf16.msra.mxu0 0
        %769 = vmatprep.subr.bf16.mxu0 0
        %770 = vmatpush1.bf16.msra.mxu0 0
        %771 = vmatprep.subr.bf16.mxu0 0
        %772 = vmatpush1.bf16.msra.mxu0 0
        %773 = vmatprep.mubr.bf16.mxu0 0
        %774 = vmatmul.mubr.bf16.gmra.mrb[0].mxu0 %v739
        %v775 = vpop.f32.mrb[0].mxu0
        %v776 = vadd.f32 %v305, %v775
        %v777 = vpop.f32.mrb[0].mxu0
        %v778 = vpop.f32.mrb[0].mxu0
        %v779 = vpop.f32.mrb[0].mxu0
        %780 = vdwg.mxu0
        %s781 = scalar_lea.vmem [#allocation2], 32
        %782 = vst.msk [vmem:[%s781] sm:$0xff] %vm413, %v776
        %v783 = vld [vmem:[%s241 + $0x5] sm:$0x1]
        %v784 = vld [vmem:[%s241 + $0xd] sm:$0x1]
        %v785 = vld [vmem:[%s241 + $0x15] sm:$0x1]
        %v786 = vld [vmem:[%s241 + $0x1d] sm:$0x1]
        %v787 = vld [vmem:[%s241 + $0x25] sm:$0x1]
        %v788 = vld [vmem:[%s241 + $0x2d] sm:$0x1]
        %v789 = vld [vmem:[%s241 + $0x35] sm:$0x1]
        %v790 = vld [vmem:[%s241 + $0x3d] sm:$0x1]
        %v791 = vpack.c.bf16 %v783, %v783
        %v792 = vpack.c.bf16 %v784, %v784
        %v793 = vpack.c.bf16 %v785, %v785
        %v794 = vpack.c.bf16 %v786, %v786
        %v795 = vpack.c.bf16 %v787, %v787
        %v796 = vpack.c.bf16 %v788, %v788
        %v797 = vpack.c.bf16 %v789, %v789
        %v798 = vpack.c.bf16 %v790, %v790
        %v807 = vunpack.c.l.b16 %v791
        %v808 = vunpack.c.l.b16 %v792
        %v809 = vunpack.c.l.b16 %v793
        %v810 = vunpack.c.l.b16 %v794
        %v811 = vunpack.c.l.b16 %v795
        %v812 = vunpack.c.l.b16 %v796
        %v813 = vunpack.c.l.b16 %v797
        %v814 = vunpack.c.l.b16 %v798
        %v815 = vrot.slane %v808, 7
        %v816 = vsel %vm324, %v815, %v807
        %v817 = vrot.slane %v809, 6
        %v818 = vsel %vm327, %v817, %v816
        %v819 = vrot.slane %v810, 5
        %v820 = vsel %vm330, %v819, %v818
        %v821 = vrot.slane %v811, 4
        %v822 = vsel %vm333, %v821, %v820
        %v823 = vrot.slane %v812, 3
        %v824 = vsel %vm336, %v823, %v822
        %v825 = vrot.slane %v813, 2
        %v826 = vsel %vm339, %v825, %v824
        %v827 = vrot.slane %v814, 1
        %v828 = vsel %vm342, %v827, %v826
        %v829 = vpack.c.b16 %v828, %v828
        %v831 = vsel %vm369, %v829, 0
        %833 = vmatprep.subr.bf16.mxu0 0
        %834 = vmatpush1.bf16.msra.mxu0 %v361
        %835 = vmatprep.subr.bf16.mxu0 0
        %836 = vmatpush1.bf16.msra.mxu0 %v362
        %837 = vmatprep.subr.bf16.mxu0 0
        %838 = vmatpush1.bf16.msra.mxu0 %v363
        %839 = vmatprep.subr.bf16.mxu0 0
        %840 = vmatpush1.bf16.msra.mxu0 %v364
        %841 = vmatprep.subr.bf16.mxu0 0
        %842 = vmatpush1.bf16.msra.mxu0 0
        %843 = vmatprep.subr.bf16.mxu0 0
        %844 = vmatpush1.bf16.msra.mxu0 0
        %845 = vmatprep.subr.bf16.mxu0 0
        %846 = vmatpush1.bf16.msra.mxu0 0
        %847 = vmatprep.subr.bf16.mxu0 0
        %848 = vmatpush1.bf16.msra.mxu0 0
        %849 = vmatprep.subr.bf16.mxu0 0
        %850 = vmatpush1.bf16.msra.mxu0 0
        %851 = vmatprep.subr.bf16.mxu0 0
        %852 = vmatpush1.bf16.msra.mxu0 0
        %853 = vmatprep.subr.bf16.mxu0 0
        %854 = vmatpush1.bf16.msra.mxu0 0
        %855 = vmatprep.subr.bf16.mxu0 0
        %856 = vmatpush1.bf16.msra.mxu0 0
        %857 = vmatprep.subr.bf16.mxu0 0
        %858 = vmatpush1.bf16.msra.mxu0 0
        %859 = vmatprep.subr.bf16.mxu0 0
        %860 = vmatpush1.bf16.msra.mxu0 0
        %861 = vmatprep.subr.bf16.mxu0 0
        %862 = vmatpush1.bf16.msra.mxu0 0
        %863 = vmatprep.subr.bf16.mxu0 0
        %864 = vmatpush1.bf16.msra.mxu0 0
        %865 = vmatprep.mubr.bf16.mxu0 0
        %866 = vmatmul.mubr.bf16.gmra.mrb[0].mxu0 %v831
        %v867 = vpop.f32.mrb[0].mxu0
        %v868 = vadd.f32 %v305, %v867
        %v869 = vpop.f32.mrb[0].mxu0
        %v870 = vpop.f32.mrb[0].mxu0
        %v871 = vpop.f32.mrb[0].mxu0
        %872 = vdwg.mxu0
        %s873 = scalar_lea.vmem [#allocation2], 40
        %874 = vst.msk [vmem:[%s873] sm:$0xff] %vm413, %v868
        %v875 = vld [vmem:[%s241 + $0x6] sm:$0x1]
        %v876 = vld [vmem:[%s241 + $0xe] sm:$0x1]
        %v877 = vld [vmem:[%s241 + $0x16] sm:$0x1]
        %v878 = vld [vmem:[%s241 + $0x1e] sm:$0x1]
        %v879 = vld [vmem:[%s241 + $0x26] sm:$0x1]
        %v880 = vld [vmem:[%s241 + $0x2e] sm:$0x1]
        %v881 = vld [vmem:[%s241 + $0x36] sm:$0x1]
        %v882 = vld [vmem:[%s241 + $0x3e] sm:$0x1]
        %v883 = vpack.c.bf16 %v875, %v875
        %v884 = vpack.c.bf16 %v876, %v876
        %v885 = vpack.c.bf16 %v877, %v877
        %v886 = vpack.c.bf16 %v878, %v878
        %v887 = vpack.c.bf16 %v879, %v879
        %v888 = vpack.c.bf16 %v880, %v880
        %v889 = vpack.c.bf16 %v881, %v881
        %v890 = vpack.c.bf16 %v882, %v882
        %v899 = vunpack.c.l.b16 %v883
        %v900 = vunpack.c.l.b16 %v884
        %v901 = vunpack.c.l.b16 %v885
        %v902 = vunpack.c.l.b16 %v886
        %v903 = vunpack.c.l.b16 %v887
        %v904 = vunpack.c.l.b16 %v888
        %v905 = vunpack.c.l.b16 %v889
        %v906 = vunpack.c.l.b16 %v890
        %v907 = vrot.slane %v900, 7
        %v908 = vsel %vm324, %v907, %v899
        %v909 = vrot.slane %v901, 6
        %v910 = vsel %vm327, %v909, %v908
        %v911 = vrot.slane %v902, 5
        %v912 = vsel %vm330, %v911, %v910
        %v913 = vrot.slane %v903, 4
        %v914 = vsel %vm333, %v913, %v912
        %v915 = vrot.slane %v904, 3
        %v916 = vsel %vm336, %v915, %v914
        %v917 = vrot.slane %v905, 2
        %v918 = vsel %vm339, %v917, %v916
        %v919 = vrot.slane %v906, 1
        %v920 = vsel %vm342, %v919, %v918
        %v921 = vpack.c.b16 %v920, %v920
        %v923 = vsel %vm369, %v921, 0
        %925 = vmatprep.subr.bf16.mxu0 0
        %926 = vmatpush1.bf16.msra.mxu0 %v361
        %927 = vmatprep.subr.bf16.mxu0 0
        %928 = vmatpush1.bf16.msra.mxu0 %v362
        %929 = vmatprep.subr.bf16.mxu0 0
        %930 = vmatpush1.bf16.msra.mxu0 %v363
        %931 = vmatprep.subr.bf16.mxu0 0
        %932 = vmatpush1.bf16.msra.mxu0 %v364
        %933 = vmatprep.subr.bf16.mxu0 0
        %934 = vmatpush1.bf16.msra.mxu0 0
        %935 = vmatprep.subr.bf16.mxu0 0
        %936 = vmatpush1.bf16.msra.mxu0 0
        %937 = vmatprep.subr.bf16.mxu0 0
        %938 = vmatpush1.bf16.msra.mxu0 0
        %939 = vmatprep.subr.bf16.mxu0 0
        %940 = vmatpush1.bf16.msra.mxu0 0
        %941 = vmatprep.subr.bf16.mxu0 0
        %942 = vmatpush1.bf16.msra.mxu0 0
        %943 = vmatprep.subr.bf16.mxu0 0
        %944 = vmatpush1.bf16.msra.mxu0 0
        %945 = vmatprep.subr.bf16.mxu0 0
        %946 = vmatpush1.bf16.msra.mxu0 0
        %947 = vmatprep.subr.bf16.mxu0 0
        %948 = vmatpush1.bf16.msra.mxu0 0
        %949 = vmatprep.subr.bf16.mxu0 0
        %950 = vmatpush1.bf16.msra.mxu0 0
        %951 = vmatprep.subr.bf16.mxu0 0
        %952 = vmatpush1.bf16.msra.mxu0 0
        %953 = vmatprep.subr.bf16.mxu0 0
        %954 = vmatpush1.bf16.msra.mxu0 0
        %955 = vmatprep.subr.bf16.mxu0 0
        %956 = vmatpush1.bf16.msra.mxu0 0
        %957 = vmatprep.mubr.bf16.mxu0 0
        %958 = vmatmul.mubr.bf16.gmra.mrb[0].mxu0 %v923
        %v959 = vpop.f32.mrb[0].mxu0
        %v960 = vadd.f32 %v305, %v959
        %v961 = vpop.f32.mrb[0].mxu0
        %v962 = vpop.f32.mrb[0].mxu0
        %v963 = vpop.f32.mrb[0].mxu0
        %964 = vdwg.mxu0
        %s965 = scalar_lea.vmem [#allocation2], 48
        %966 = vst.msk [vmem:[%s965] sm:$0xff] %vm413, %v960
        %v967 = vld [vmem:[%s241 + $0x7] sm:$0x1]
        %v968 = vld [vmem:[%s241 + $0xf] sm:$0x1]
        %v969 = vld [vmem:[%s241 + $0x17] sm:$0x1]
        %v970 = vld [vmem:[%s241 + $0x1f] sm:$0x1]
        %v971 = vld [vmem:[%s241 + $0x27] sm:$0x1]
        %v972 = vld [vmem:[%s241 + $0x2f] sm:$0x1]
        %v973 = vld [vmem:[%s241 + $0x37] sm:$0x1]
        %v974 = vld [vmem:[%s241 + $0x3f] sm:$0x1]
        %v975 = vpack.c.bf16 %v967, %v967
        %v976 = vpack.c.bf16 %v968, %v968
        %v977 = vpack.c.bf16 %v969, %v969
        %v978 = vpack.c.bf16 %v970, %v970
        %v979 = vpack.c.bf16 %v971, %v971
        %v980 = vpack.c.bf16 %v972, %v972
        %v981 = vpack.c.bf16 %v973, %v973
        %v982 = vpack.c.bf16 %v974, %v974
        %v991 = vunpack.c.l.b16 %v975
        %v992 = vunpack.c.l.b16 %v976
        %v993 = vunpack.c.l.b16 %v977
        %v994 = vunpack.c.l.b16 %v978
        %v995 = vunpack.c.l.b16 %v979
        %v996 = vunpack.c.l.b16 %v980
        %v997 = vunpack.c.l.b16 %v981
        %v998 = vunpack.c.l.b16 %v982
        %v999 = vrot.slane %v992, 7
        %v1000 = vsel %vm324, %v999, %v991
        %v1001 = vrot.slane %v993, 6
        %v1002 = vsel %vm327, %v1001, %v1000
        %v1003 = vrot.slane %v994, 5
        %v1004 = vsel %vm330, %v1003, %v1002
        %v1005 = vrot.slane %v995, 4
        %v1006 = vsel %vm333, %v1005, %v1004
        %v1007 = vrot.slane %v996, 3
        %v1008 = vsel %vm336, %v1007, %v1006
        %v1009 = vrot.slane %v997, 2
        %v1010 = vsel %vm339, %v1009, %v1008
        %v1011 = vrot.slane %v998, 1
        %v1012 = vsel %vm342, %v1011, %v1010
        %v1013 = vpack.c.b16 %v1012, %v1012
        %v1015 = vsel %vm369, %v1013, 0
        %1017 = vmatprep.subr.bf16.mxu0 0
        %1018 = vmatpush1.bf16.msra.mxu0 %v361
        %1019 = vmatprep.subr.bf16.mxu0 0
        %1020 = vmatpush1.bf16.msra.mxu0 %v362
        %1021 = vmatprep.subr.bf16.mxu0 0
        %1022 = vmatpush1.bf16.msra.mxu0 %v363
        %1023 = vmatprep.subr.bf16.mxu0 0
        %1024 = vmatpush1.bf16.msra.mxu0 %v364
        %1025 = vmatprep.subr.bf16.mxu0 0
        %1026 = vmatpush1.bf16.msra.mxu0 0
        %1027 = vmatprep.subr.bf16.mxu0 0
        %1028 = vmatpush1.bf16.msra.mxu0 0
        %1029 = vmatprep.subr.bf16.mxu0 0
        %1030 = vmatpush1.bf16.msra.mxu0 0
        %1031 = vmatprep.subr.bf16.mxu0 0
        %1032 = vmatpush1.bf16.msra.mxu0 0
        %1033 = vmatprep.subr.bf16.mxu0 0
        %1034 = vmatpush1.bf16.msra.mxu0 0
        %1035 = vmatprep.subr.bf16.mxu0 0
        %1036 = vmatpush1.bf16.msra.mxu0 0
        %1037 = vmatprep.subr.bf16.mxu0 0
        %1038 = vmatpush1.bf16.msra.mxu0 0
        %1039 = vmatprep.subr.bf16.mxu0 0
        %1040 = vmatpush1.bf16.msra.mxu0 0
        %1041 = vmatprep.subr.bf16.mxu0 0
        %1042 = vmatpush1.bf16.msra.mxu0 0
        %1043 = vmatprep.subr.bf16.mxu0 0
        %1044 = vmatpush1.bf16.msra.mxu0 0
        %1045 = vmatprep.subr.bf16.mxu0 0
        %1046 = vmatpush1.bf16.msra.mxu0 0
        %1047 = vmatprep.subr.bf16.mxu0 0
        %1048 = vmatpush1.bf16.msra.mxu0 0
        %1049 = vmatprep.mubr.bf16.mxu0 0
        %1050 = vmatmul.mubr.bf16.gmra.mrb[0].mxu0 %v1015
        %v1051 = vpop.f32.mrb[0].mxu0
        %v1052 = vadd.f32 %v305, %v1051
        %v1053 = vpop.f32.mrb[0].mxu0
        %v1054 = vpop.f32.mrb[0].mxu0
        %v1055 = vpop.f32.mrb[0].mxu0
        %1056 = vdwg.mxu0
        %s1057 = scalar_lea.vmem [#allocation2], 56
        %1058 = vst.msk [vmem:[%s1057] sm:$0xff] %vm413, %v1052
        %v1059 = vld [vmem:[%s5] sm:$0x1]
        %v1061 = vlaneseq
        %v1062 = vshrl.u32 %v1061, 7
        %v1063 = vsub.s32 0, %v1062
        %v1064 = vrot.slane %v1059, %v1063
        %v1066 = vpack.c.bf16 %v1064, %v1064
        %v1067 = vld [vmem:[#allocation2] sm:$0xff]
        %v1072 = vunpack.c.l.b16 %v280
        %v1073 = vunpack.c.l.b16 %v281
        %v1074 = vunpack.c.l.b16 %v282
        %v1075 = vunpack.c.l.b16 %v283
        %v1076 = vpack.c.b16 %v1073, %v1072
        %v1077 = vpack.c.b16 %v1075, %v1074
        %v1081 = vsel %vm413, %v1066, 0
        %1083 = vmatprep.subr.bf16.mxu0 0
        %1084 = vmatpush1.bf16.msra.mxu0 %v1076
        %1085 = vmatprep.subr.bf16.mxu0 0
        %1086 = vmatpush1.bf16.msra.mxu0 %v1077
        %1087 = vmatprep.subr.bf16.mxu0 0
        %1088 = vmatpush1.bf16.msra.mxu0 0
        %1089 = vmatprep.subr.bf16.mxu0 0
        %1090 = vmatpush1.bf16.msra.mxu0 0
        %1091 = vmatprep.subr.bf16.mxu0 0
        %1092 = vmatpush1.bf16.msra.mxu0 0
        %1093 = vmatprep.subr.bf16.mxu0 0
        %1094 = vmatpush1.bf16.msra.mxu0 0
        %1095 = vmatprep.subr.bf16.mxu0 0
        %1096 = vmatpush1.bf16.msra.mxu0 0
        %1097 = vmatprep.subr.bf16.mxu0 0
        %1098 = vmatpush1.bf16.msra.mxu0 0
        %1099 = vmatprep.subr.bf16.mxu0 0
        %1100 = vmatpush1.bf16.msra.mxu0 0
        %1101 = vmatprep.subr.bf16.mxu0 0
        %1102 = vmatpush1.bf16.msra.mxu0 0
        %1103 = vmatprep.subr.bf16.mxu0 0
        %1104 = vmatpush1.bf16.msra.mxu0 0
        %1105 = vmatprep.subr.bf16.mxu0 0
        %1106 = vmatpush1.bf16.msra.mxu0 0
        %1107 = vmatprep.subr.bf16.mxu0 0
        %1108 = vmatpush1.bf16.msra.mxu0 0
        %1109 = vmatprep.subr.bf16.mxu0 0
        %1110 = vmatpush1.bf16.msra.mxu0 0
        %1111 = vmatprep.subr.bf16.mxu0 0
        %1112 = vmatpush1.bf16.msra.mxu0 0
        %1113 = vmatprep.subr.bf16.mxu0 0
        %1114 = vmatpush1.bf16.msra.mxu0 0
        %1115 = vmatprep.mubr.bf16.mxu0 0
        %1116 = vmatmul.mubr.bf16.gmra.mrb[0].mxu0 %v1081
        %v1117 = vpop.f32.mrb[0].mxu0
        %v1118 = vadd.f32 %v1067, %v1117
        %v1119 = vpop.f32.mrb[0].mxu0
        %v1120 = vpop.f32.mrb[0].mxu0
        %v1121 = vpop.f32.mrb[0].mxu0
        %1122 = vdwg.mxu0
        %v1123 = vtanh.pop %v1118
        %v1124 = vpack.c.bf16 %v1123, %v1123
        %v1125 = vld [vmem:[%s505] sm:$0xff]
        %v1127 = vsel %vm413, %v1124, 0
        %1129 = vmatprep.subr.bf16.mxu0 0
        %1130 = vmatpush1.bf16.msra.mxu0 %v1076
        %1131 = vmatprep.subr.bf16.mxu0 0
        %1132 = vmatpush1.bf16.msra.mxu0 %v1077
        %1133 = vmatprep.subr.bf16.mxu0 0
        %1134 = vmatpush1.bf16.msra.mxu0 0
        %1135 = vmatprep.subr.bf16.mxu0 0
        %1136 = vmatpush1.bf16.msra.mxu0 0
        %1137 = vmatprep.subr.bf16.mxu0 0
        %1138 = vmatpush1.bf16.msra.mxu0 0
        %1139 = vmatprep.subr.bf16.mxu0 0
        %1140 = vmatpush1.bf16.msra.mxu0 0
        %1141 = vmatprep.subr.bf16.mxu0 0
        %1142 = vmatpush1.bf16.msra.mxu0 0
        %1143 = vmatprep.subr.bf16.mxu0 0
        %1144 = vmatpush1.bf16.msra.mxu0 0
        %1145 = vmatprep.subr.bf16.mxu0 0
        %1146 = vmatpush1.bf16.msra.mxu0 0
        %1147 = vmatprep.subr.bf16.mxu0 0
        %1148 = vmatpush1.bf16.msra.mxu0 0
        %1149 = vmatprep.subr.bf16.mxu0 0
        %1150 = vmatpush1.bf16.msra.mxu0 0
        %1151 = vmatprep.subr.bf16.mxu0 0
        %1152 = vmatpush1.bf16.msra.mxu0 0
        %1153 = vmatprep.subr.bf16.mxu0 0
        %1154 = vmatpush1.bf16.msra.mxu0 0
        %1155 = vmatprep.subr.bf16.mxu0 0
        %1156 = vmatpush1.bf16.msra.mxu0 0
        %1157 = vmatprep.subr.bf16.mxu0 0
        %1158 = vmatpush1.bf16.msra.mxu0 0
        %1159 = vmatprep.subr.bf16.mxu0 0
        %1160 = vmatpush1.bf16.msra.mxu0 0
        %1161 = vmatprep.mubr.bf16.mxu0 0
        %1162 = vmatmul.mubr.bf16.gmra.mrb[0].mxu0 %v1127
        %v1163 = vpop.f32.mrb[0].mxu0
        %v1164 = vadd.f32 %v1125, %v1163
        %v1165 = vpop.f32.mrb[0].mxu0
        %v1166 = vpop.f32.mrb[0].mxu0
        %v1167 = vpop.f32.mrb[0].mxu0
        %1168 = vdwg.mxu0
        %v1169 = vtanh.pop %v1164
        %v1170 = vpack.c.bf16 %v1169, %v1169
        %v1171 = vld [vmem:[%s597] sm:$0xff]
        %v1173 = vsel %vm413, %v1170, 0
        %1175 = vmatprep.subr.bf16.mxu0 0
        %1176 = vmatpush1.bf16.msra.mxu0 %v1076
        %1177 = vmatprep.subr.bf16.mxu0 0
        %1178 = vmatpush1.bf16.msra.mxu0 %v1077
        %1179 = vmatprep.subr.bf16.mxu0 0
        %1180 = vmatpush1.bf16.msra.mxu0 0
        %1181 = vmatprep.subr.bf16.mxu0 0
        %1182 = vmatpush1.bf16.msra.mxu0 0
        %1183 = vmatprep.subr.bf16.mxu0 0
        %1184 = vmatpush1.bf16.msra.mxu0 0
        %1185 = vmatprep.subr.bf16.mxu0 0
        %1186 = vmatpush1.bf16.msra.mxu0 0
        %1187 = vmatprep.subr.bf16.mxu0 0
        %1188 = vmatpush1.bf16.msra.mxu0 0
        %1189 = vmatprep.subr.bf16.mxu0 0
        %1190 = vmatpush1.bf16.msra.mxu0 0
        %1191 = vmatprep.subr.bf16.mxu0 0
        %1192 = vmatpush1.bf16.msra.mxu0 0
        %1193 = vmatprep.subr.bf16.mxu0 0
        %1194 = vmatpush1.bf16.msra.mxu0 0
        %1195 = vmatprep.subr.bf16.mxu0 0
        %1196 = vmatpush1.bf16.msra.mxu0 0
        %1197 = vmatprep.subr.bf16.mxu0 0
        %1198 = vmatpush1.bf16.msra.mxu0 0
        %1199 = vmatprep.subr.bf16.mxu0 0
        %1200 = vmatpush1.bf16.msra.mxu0 0
        %1201 = vmatprep.subr.bf16.mxu0 0
        %1202 = vmatpush1.bf16.msra.mxu0 0
        %1203 = vmatprep.subr.bf16.mxu0 0
        %1204 = vmatpush1.bf16.msra.mxu0 0
        %1205 = vmatprep.subr.bf16.mxu0 0
        %1206 = vmatpush1.bf16.msra.mxu0 0
        %1207 = vmatprep.mubr.bf16.mxu0 0
        %1208 = vmatmul.mubr.bf16.gmra.mrb[0].mxu0 %v1173
        %v1209 = vpop.f32.mrb[0].mxu0
        %v1210 = vadd.f32 %v1171, %v1209
        %v1211 = vpop.f32.mrb[0].mxu0
        %v1212 = vpop.f32.mrb[0].mxu0
        %v1213 = vpop.f32.mrb[0].mxu0
        %1214 = vdwg.mxu0
        %v1215 = vtanh.pop %v1210
        %v1216 = vpack.c.bf16 %v1215, %v1215
        %v1217 = vld [vmem:[%s689] sm:$0xff]
        %v1219 = vsel %vm413, %v1216, 0
        %1221 = vmatprep.subr.bf16.mxu0 0
        %1222 = vmatpush1.bf16.msra.mxu0 %v1076
        %1223 = vmatprep.subr.bf16.mxu0 0
        %1224 = vmatpush1.bf16.msra.mxu0 %v1077
        %1225 = vmatprep.subr.bf16.mxu0 0
        %1226 = vmatpush1.bf16.msra.mxu0 0
        %1227 = vmatprep.subr.bf16.mxu0 0
        %1228 = vmatpush1.bf16.msra.mxu0 0
        %1229 = vmatprep.subr.bf16.mxu0 0
        %1230 = vmatpush1.bf16.msra.mxu0 0
        %1231 = vmatprep.subr.bf16.mxu0 0
        %1232 = vmatpush1.bf16.msra.mxu0 0
        %1233 = vmatprep.subr.bf16.mxu0 0
        %1234 = vmatpush1.bf16.msra.mxu0 0
        %1235 = vmatprep.subr.bf16.mxu0 0
        %1236 = vmatpush1.bf16.msra.mxu0 0
        %1237 = vmatprep.subr.bf16.mxu0 0
        %1238 = vmatpush1.bf16.msra.mxu0 0
        %1239 = vmatprep.subr.bf16.mxu0 0
        %1240 = vmatpush1.bf16.msra.mxu0 0
        %1241 = vmatprep.subr.bf16.mxu0 0
        %1242 = vmatpush1.bf16.msra.mxu0 0
        %1243 = vmatprep.subr.bf16.mxu0 0
        %1244 = vmatpush1.bf16.msra.mxu0 0
        %1245 = vmatprep.subr.bf16.mxu0 0
        %1246 = vmatpush1.bf16.msra.mxu0 0
        %1247 = vmatprep.subr.bf16.mxu0 0
        %1248 = vmatpush1.bf16.msra.mxu0 0
        %1249 = vmatprep.subr.bf16.mxu0 0
        %1250 = vmatpush1.bf16.msra.mxu0 0
        %1251 = vmatprep.subr.bf16.mxu0 0
        %1252 = vmatpush1.bf16.msra.mxu0 0
        %1253 = vmatprep.mubr.bf16.mxu0 0
        %1254 = vmatmul.mubr.bf16.gmra.mrb[0].mxu0 %v1219
        %v1255 = vpop.f32.mrb[0].mxu0
        %v1256 = vadd.f32 %v1217, %v1255
        %v1257 = vpop.f32.mrb[0].mxu0
        %v1258 = vpop.f32.mrb[0].mxu0
        %v1259 = vpop.f32.mrb[0].mxu0
        %1260 = vdwg.mxu0
        %v1261 = vtanh.pop %v1256
        %v1262 = vpack.c.bf16 %v1261, %v1261
        %v1263 = vld [vmem:[%s781] sm:$0xff]
        %v1265 = vsel %vm413, %v1262, 0
        %1267 = vmatprep.subr.bf16.mxu0 0
        %1268 = vmatpush1.bf16.msra.mxu0 %v1076
        %1269 = vmatprep.subr.bf16.mxu0 0
        %1270 = vmatpush1.bf16.msra.mxu0 %v1077
        %1271 = vmatprep.subr.bf16.mxu0 0
        %1272 = vmatpush1.bf16.msra.mxu0 0
        %1273 = vmatprep.subr.bf16.mxu0 0
        %1274 = vmatpush1.bf16.msra.mxu0 0
        %1275 = vmatprep.subr.bf16.mxu0 0
        %1276 = vmatpush1.bf16.msra.mxu0 0
        %1277 = vmatprep.subr.bf16.mxu0 0
        %1278 = vmatpush1.bf16.msra.mxu0 0
        %1279 = vmatprep.subr.bf16.mxu0 0
        %1280 = vmatpush1.bf16.msra.mxu0 0
        %1281 = vmatprep.subr.bf16.mxu0 0
        %1282 = vmatpush1.bf16.msra.mxu0 0
        %1283 = vmatprep.subr.bf16.mxu0 0
        %1284 = vmatpush1.bf16.msra.mxu0 0
        %1285 = vmatprep.subr.bf16.mxu0 0
        %1286 = vmatpush1.bf16.msra.mxu0 0
        %1287 = vmatprep.subr.bf16.mxu0 0
        %1288 = vmatpush1.bf16.msra.mxu0 0
        %1289 = vmatprep.subr.bf16.mxu0 0
        %1290 = vmatpush1.bf16.msra.mxu0 0
        %1291 = vmatprep.subr.bf16.mxu0 0
        %1292 = vmatpush1.bf16.msra.mxu0 0
        %1293 = vmatprep.subr.bf16.mxu0 0
        %1294 = vmatpush1.bf16.msra.mxu0 0
        %1295 = vmatprep.subr.bf16.mxu0 0
        %1296 = vmatpush1.bf16.msra.mxu0 0
        %1297 = vmatprep.subr.bf16.mxu0 0
        %1298 = vmatpush1.bf16.msra.mxu0 0
        %1299 = vmatprep.mubr.bf16.mxu0 0
        %1300 = vmatmul.mubr.bf16.gmra.mrb[0].mxu0 %v1265
        %v1301 = vpop.f32.mrb[0].mxu0
        %v1302 = vadd.f32 %v1263, %v1301
        %v1303 = vpop.f32.mrb[0].mxu0
        %v1304 = vpop.f32.mrb[0].mxu0
        %v1305 = vpop.f32.mrb[0].mxu0
        %1306 = vdwg.mxu0
        %v1307 = vtanh.pop %v1302
        %v1308 = vpack.c.bf16 %v1307, %v1307
        %v1309 = vld [vmem:[%s873] sm:$0xff]
        %v1311 = vsel %vm413, %v1308, 0
        %1313 = vmatprep.subr.bf16.mxu0 0
        %1314 = vmatpush1.bf16.msra.mxu0 %v1076
        %1315 = vmatprep.subr.bf16.mxu0 0
        %1316 = vmatpush1.bf16.msra.mxu0 %v1077
        %1317 = vmatprep.subr.bf16.mxu0 0
        %1318 = vmatpush1.bf16.msra.mxu0 0
        %1319 = vmatprep.subr.bf16.mxu0 0
        %1320 = vmatpush1.bf16.msra.mxu0 0
        %1321 = vmatprep.subr.bf16.mxu0 0
        %1322 = vmatpush1.bf16.msra.mxu0 0
        %1323 = vmatprep.subr.bf16.mxu0 0
        %1324 = vmatpush1.bf16.msra.mxu0 0
        %1325 = vmatprep.subr.bf16.mxu0 0
        %1326 = vmatpush1.bf16.msra.mxu0 0
        %1327 = vmatprep.subr.bf16.mxu0 0
        %1328 = vmatpush1.bf16.msra.mxu0 0
        %1329 = vmatprep.subr.bf16.mxu0 0
        %1330 = vmatpush1.bf16.msra.mxu0 0
        %1331 = vmatprep.subr.bf16.mxu0 0
        %1332 = vmatpush1.bf16.msra.mxu0 0
        %1333 = vmatprep.subr.bf16.mxu0 0
        %1334 = vmatpush1.bf16.msra.mxu0 0
        %1335 = vmatprep.subr.bf16.mxu0 0
        %1336 = vmatpush1.bf16.msra.mxu0 0
        %1337 = vmatprep.subr.bf16.mxu0 0
        %1338 = vmatpush1.bf16.msra.mxu0 0
        %1339 = vmatprep.subr.bf16.mxu0 0
        %1340 = vmatpush1.bf16.msra.mxu0 0
        %1341 = vmatprep.subr.bf16.mxu0 0
        %1342 = vmatpush1.bf16.msra.mxu0 0
        %1343 = vmatprep.subr.bf16.mxu0 0
        %1344 = vmatpush1.bf16.msra.mxu0 0
        %1345 = vmatprep.mubr.bf16.mxu0 0
        %1346 = vmatmul.mubr.bf16.gmra.mrb[0].mxu0 %v1311
        %v1347 = vpop.f32.mrb[0].mxu0
        %v1348 = vadd.f32 %v1309, %v1347
        %v1349 = vpop.f32.mrb[0].mxu0
        %v1350 = vpop.f32.mrb[0].mxu0
        %v1351 = vpop.f32.mrb[0].mxu0
        %1352 = vdwg.mxu0
        %v1353 = vtanh.pop %v1348
        %v1354 = vpack.c.bf16 %v1353, %v1353
        %v1355 = vld [vmem:[%s965] sm:$0xff]
        %v1357 = vsel %vm413, %v1354, 0
        %1359 = vmatprep.subr.bf16.mxu0 0
        %1360 = vmatpush1.bf16.msra.mxu0 %v1076
        %1361 = vmatprep.subr.bf16.mxu0 0
        %1362 = vmatpush1.bf16.msra.mxu0 %v1077
        %1363 = vmatprep.subr.bf16.mxu0 0
        %1364 = vmatpush1.bf16.msra.mxu0 0
        %1365 = vmatprep.subr.bf16.mxu0 0
        %1366 = vmatpush1.bf16.msra.mxu0 0
        %1367 = vmatprep.subr.bf16.mxu0 0
        %1368 = vmatpush1.bf16.msra.mxu0 0
        %1369 = vmatprep.subr.bf16.mxu0 0
        %1370 = vmatpush1.bf16.msra.mxu0 0
        %1371 = vmatprep.subr.bf16.mxu0 0
        %1372 = vmatpush1.bf16.msra.mxu0 0
        %1373 = vmatprep.subr.bf16.mxu0 0
        %1374 = vmatpush1.bf16.msra.mxu0 0
        %1375 = vmatprep.subr.bf16.mxu0 0
        %1376 = vmatpush1.bf16.msra.mxu0 0
        %1377 = vmatprep.subr.bf16.mxu0 0
        %1378 = vmatpush1.bf16.msra.mxu0 0
        %1379 = vmatprep.subr.bf16.mxu0 0
        %1380 = vmatpush1.bf16.msra.mxu0 0
        %1381 = vmatprep.subr.bf16.mxu0 0
        %1382 = vmatpush1.bf16.msra.mxu0 0
        %1383 = vmatprep.subr.bf16.mxu0 0
        %1384 = vmatpush1.bf16.msra.mxu0 0
        %1385 = vmatprep.subr.bf16.mxu0 0
        %1386 = vmatpush1.bf16.msra.mxu0 0
        %1387 = vmatprep.subr.bf16.mxu0 0
        %1388 = vmatpush1.bf16.msra.mxu0 0
        %1389 = vmatprep.subr.bf16.mxu0 0
        %1390 = vmatpush1.bf16.msra.mxu0 0
        %1391 = vmatprep.mubr.bf16.mxu0 0
        %1392 = vmatmul.mubr.bf16.gmra.mrb[0].mxu0 %v1357
        %v1393 = vpop.f32.mrb[0].mxu0
        %v1394 = vadd.f32 %v1355, %v1393
        %v1395 = vpop.f32.mrb[0].mxu0
        %v1396 = vpop.f32.mrb[0].mxu0
        %v1397 = vpop.f32.mrb[0].mxu0
        %1398 = vdwg.mxu0
        %v1399 = vtanh.pop %v1394
        %v1400 = vpack.c.bf16 %v1399, %v1399
        %v1401 = vld [vmem:[%s1057] sm:$0xff]
        %v1403 = vsel %vm413, %v1400, 0
        %1405 = vmatprep.subr.bf16.mxu0 0
        %1406 = vmatpush1.bf16.msra.mxu0 %v1076
        %1407 = vmatprep.subr.bf16.mxu0 0
        %1408 = vmatpush1.bf16.msra.mxu0 %v1077
        %1409 = vmatprep.subr.bf16.mxu0 0
        %1410 = vmatpush1.bf16.msra.mxu0 0
        %1411 = vmatprep.subr.bf16.mxu0 0
        %1412 = vmatpush1.bf16.msra.mxu0 0
        %1413 = vmatprep.subr.bf16.mxu0 0
        %1414 = vmatpush1.bf16.msra.mxu0 0
        %1415 = vmatprep.subr.bf16.mxu0 0
        %1416 = vmatpush1.bf16.msra.mxu0 0
        %1417 = vmatprep.subr.bf16.mxu0 0
        %1418 = vmatpush1.bf16.msra.mxu0 0
        %1419 = vmatprep.subr.bf16.mxu0 0
        %1420 = vmatpush1.bf16.msra.mxu0 0
        %1421 = vmatprep.subr.bf16.mxu0 0
        %1422 = vmatpush1.bf16.msra.mxu0 0
        %1423 = vmatprep.subr.bf16.mxu0 0
        %1424 = vmatpush1.bf16.msra.mxu0 0
        %1425 = vmatprep.subr.bf16.mxu0 0
        %1426 = vmatpush1.bf16.msra.mxu0 0
        %1427 = vmatprep.subr.bf16.mxu0 0
        %1428 = vmatpush1.bf16.msra.mxu0 0
        %1429 = vmatprep.subr.bf16.mxu0 0
        %1430 = vmatpush1.bf16.msra.mxu0 0
        %1431 = vmatprep.subr.bf16.mxu0 0
        %1432 = vmatpush1.bf16.msra.mxu0 0
        %1433 = vmatprep.subr.bf16.mxu0 0
        %1434 = vmatpush1.bf16.msra.mxu0 0
        %1435 = vmatprep.subr.bf16.mxu0 0
        %1436 = vmatpush1.bf16.msra.mxu0 0
        %1437 = vmatprep.mubr.bf16.mxu0 0
        %1438 = vmatmul.mubr.bf16.gmra.mrb[0].mxu0 %v1403
        %v1439 = vpop.f32.mrb[0].mxu0
        %v1440 = vadd.f32 %v1401, %v1439
        %v1441 = vpop.f32.mrb[0].mxu0
        %v1442 = vpop.f32.mrb[0].mxu0
        %v1443 = vpop.f32.mrb[0].mxu0
        %1444 = vdwg.mxu0
        %v1445 = vtanh.pop %v1440
        %v1446 = vld [vmem:[%s3] sm:$0xff]
        %v1447 = vld [vmem:[%s3 + $0x8] sm:$0xff]
        %v1448 = vld [vmem:[%s3 + $0x10] sm:$0xff]
        %v1449 = vld [vmem:[%s3 + $0x18] sm:$0xff]
        %v1451 = vsel %vm413, %v1445, 0
        %1453 = vmatprep.subr.mxu0 0.0
        %1454 = vmatpush1.msra.mxu0 %v1446
        %1455 = vmatprep.subr.mxu0 0.0
        %1456 = vmatpush1.msra.mxu0 %v1447
        %1457 = vmatprep.subr.mxu0 0.0
        %1458 = vmatpush1.msra.mxu0 %v1448
        %1459 = vmatprep.subr.mxu0 0.0
        %1460 = vmatpush1.msra.mxu0 %v1449
        %1461 = vmatprep.subr.mxu0 0.0
        %1462 = vmatpush1.msra.mxu0 0.0
        %1463 = vmatprep.subr.mxu0 0.0
        %1464 = vmatpush1.msra.mxu0 0.0
        %1465 = vmatprep.subr.mxu0 0.0
        %1466 = vmatpush1.msra.mxu0 0.0
        %1467 = vmatprep.subr.mxu0 0.0
        %1468 = vmatpush1.msra.mxu0 0.0
        %1469 = vmatprep.subr.mxu0 0.0
        %1470 = vmatpush1.msra.mxu0 0.0
        %1471 = vmatprep.subr.mxu0 0.0
        %1472 = vmatpush1.msra.mxu0 0.0
        %1473 = vmatprep.subr.mxu0 0.0
        %1474 = vmatpush1.msra.mxu0 0.0
        %1475 = vmatprep.subr.mxu0 0.0
        %1476 = vmatpush1.msra.mxu0 0.0
        %1477 = vmatprep.subr.mxu0 0.0
        %1478 = vmatpush1.msra.mxu0 0.0
        %1479 = vmatprep.subr.mxu0 0.0
        %1480 = vmatpush1.msra.mxu0 0.0
        %1481 = vmatprep.subr.mxu0 0.0
        %1482 = vmatpush1.msra.mxu0 0.0
        %1483 = vmatprep.subr.mxu0 0.0
        %1484 = vmatpush1.msra.mxu0 0.0
        %1485 = vmatprep.subr.mxu0 0.0
        %1486 = vmatpush1.msra.mxu0 0.0
        %1487 = vmatprep.subr.mxu0 0.0
        %1488 = vmatpush1.msra.mxu0 0.0
        %1489 = vmatprep.subr.mxu0 0.0
        %1490 = vmatpush1.msra.mxu0 0.0
        %1491 = vmatprep.subr.mxu0 0.0
        %1492 = vmatpush1.msra.mxu0 0.0
        %1493 = vmatprep.subr.mxu0 0.0
        %1494 = vmatpush1.msra.mxu0 0.0
        %1495 = vmatprep.subr.mxu0 0.0
        %1496 = vmatpush1.msra.mxu0 0.0
        %1497 = vmatprep.subr.mxu0 0.0
        %1498 = vmatpush1.msra.mxu0 0.0
        %1499 = vmatprep.subr.mxu0 0.0
        %1500 = vmatpush1.msra.mxu0 0.0
        %1501 = vmatprep.subr.mxu0 0.0
        %1502 = vmatpush1.msra.mxu0 0.0
        %1503 = vmatprep.subr.mxu0 0.0
        %1504 = vmatpush1.msra.mxu0 0.0
        %1505 = vmatprep.subr.mxu0 0.0
        %1506 = vmatpush1.msra.mxu0 0.0
        %1507 = vmatprep.subr.mxu0 0.0
        %1508 = vmatpush1.msra.mxu0 0.0
        %1509 = vmatprep.subr.mxu0 0.0
        %1510 = vmatpush1.msra.mxu0 0.0
        %1511 = vmatprep.subr.mxu0 0.0
        %1512 = vmatpush1.msra.mxu0 0.0
        %1513 = vmatprep.subr.mxu0 0.0
        %1514 = vmatpush1.msra.mxu0 0.0
        %1515 = vmatprep.subr.mxu0 0.0
        %1516 = vmatpush1.msra.mxu0 0.0
        %1517 = vmatprep.mubr.f32.mxu0 0.0
        %1518 = vmatmul.mubr.f32.gmra.mrb[0].mxu0 %v1451
        %v1519 = vpop.f32.mrb[0].mxu0
        %v1520 = vadd.f32 0.0, %v1519
        %v1521 = vpop.f32.mrb[0].mxu0
        %1522 = vdwg.mxu0
        %v1523 = vlaneseq
        %v1524 = vand.u32 %v1523, 127
        %vm1525 = vcmp.lt.s32.totalorder %v1524, 8
        %v1526 = vsel %vm1525, %v1520, -1e+30
        %1527 = vmax.xlane.f32.xlu0 %v1526
        %v1528 = vpop.xlane.xlu0 %1527
        %v1529 = vsub.f32 %v1526, %v1528
        %v1530 = vmul.f32 %v1529, 1.442695
        %v1531 = vpow.pop %v1530
        %v1532 = vsel %vm1525, %v1531, 0.0
        %1533 = vadd.xlane.f32.xlu0 %v1532
        %v1534 = vpop.xlane.xlu0 %1533
        %v1535 = vrcp.pop %v1534
        %v1536 = vmul.f32 %v1532, %v1535
        %1537 = vst [vmem:[%s269] sm:$0xff] %v1536
        %s1538 = sand.u32 %s162, 1
        %s1539 = scalar_lea.sflag [#allocation5], %s1538
        %s1540 = sand.u32 %s162, 1
        %s1541 = smul.addr %s1540, 8
        %s1542 = scalar_lea.vmem [#allocation6], %s1541
        // Predicated region
        $region49: #{tpu_custom_call.1} parent=43 // pred_check
          %p1543 = pneg %p172
        $region50: #{tpu_custom_call.1} parent=43 // pred_check_branch
          %1545 = sbr.rel (%p1543) target = $region52
        $region51: #{tpu_custom_call.1} parent=43 // pred_region
          %s1547 = ssub.s32 128, 128
          %1548 = vsyncadd %s1539, %s1547
          %s1549 = smul.addr %s23, 128
          %s1550 = scalar_lea.hbm %s6, %s1549
          %s1552 = sshll.u32 %s1542, 4
          %s1553 = int_to_ptr.vmem [resolvable:$true] %s1552
          %1555 = dma.vmem_to_hbm [thread:$0]  %s1553, 128, %s1550, %s1539
        $region52: #{tpu_custom_call.1} parent=43 // pred_fallthru
          _
      $region44: #{tpu_custom_call.1} parent=5 // pred_fallthru
        _
      %p1556 = scmp.le.s32.totalorder 2, %s18
      // Predicated region
      $region53: #{tpu_custom_call.1} parent=5 // pred_check
        %p1557 = pneg %p1556
      $region54: #{tpu_custom_call.1} parent=5 // pred_check_branch
        %1559 = sbr.rel (%p1557) target = $region56
      $region55: #{tpu_custom_call.1} parent=5 // pred_region
        %s1560 = ssub.s32 %s18, 2
        // Predicated region
        $region57: #{tpu_custom_call.1} parent=55 // pred_check
          %p1561 = pneg %p178
        $region58: #{tpu_custom_call.1} parent=55 // pred_check_branch
          %1563 = sbr.rel (%p1561) target = $region60
        $region59: #{tpu_custom_call.1} parent=55 // pred_region
          %s1564 = sand.u32 %s163, 1
          %s1565 = scalar_lea.sflag [#allocation5], %s1564
          %s1566 = sand.u32 %s163, 1
          %s1567 = smul.addr %s1566, 8
          %s1568 = scalar_lea.vmem [#allocation6], %s1567
          %1569 = dma.done %s1565, 128
        $region60: #{tpu_custom_call.1} parent=55 // pred_fallthru
          _
      $region56: #{tpu_custom_call.1} parent=5 // pred_fallthru
        _
    $region6: #{tpu_custom_call.1} parent=1 // loop_footer
      %s22 = sadd.s32 1, %s18
    $region7: #{tpu_custom_call.1} parent=1 // loop_footer_branch
      %17 = sbr.rel target = $region3
    $region8: #{tpu_custom_call.1} parent=1 // loop_exit
      _
    %1570 = vsyncpa [#allocation4], 1
    %s1571 = scalar_lea.sflag [#allocation4], 1
    %1572 = vsyncpa %s1571, 1
    %1573 = vsyncpa [#allocation5], 1
    %s1574 = scalar_lea.sflag [#allocation5], 1
    %1575 = vsyncpa %s1574, 1

</llo_original>
